<compile_context>
chip_gen: v5e
topology: v5e:2x2
jax: 0.10.0
libtpu: 0.0.40
codegen_flags: <defaults>
</compile_context>

<pallas_src>
import math

import jax
import jax.numpy as jnp
from jax.experimental import pallas as pl
from jax.experimental.pallas import tpu as pltpu

# ----------------------------- config ---------------------------------------
VOCAB_SIZE = 100
VOCAB_PAD = 128            # pad vocab to one lane tile for the one-hot gather
MAX_POS = 64
TYPE_VOCAB = 2
HIDDEN = 32
NUM_HEADS = 2
HEAD_DIM = HIDDEN // NUM_HEADS
INTERMEDIATE = 64
NUM_LAYERS = 2
NUM_LABELS = 3
LN_EPS = 1e-12

BATCH = 2
SEQ = 8
SEQ1 = SEQ + 1             # after prepending the mean token
SEQ_PAD = 16               # padded to a multiple of the 8-sublane f32 tile


# --------------------------- helpers (in-kernel) -----------------------------
def _layer_norm(x, g, b):
    mu = jnp.mean(x, axis=-1, keepdims=True)
    var = jnp.mean(jnp.square(x - mu), axis=-1, keepdims=True)
    return (x - mu) * jax.lax.rsqrt(var + LN_EPS) * g + b


def _gelu(x):
    # TODO(synk): tanh-approx GELU (EUP-friendly); HF BERT default is exact erf.
    return 0.5 * x * (1.0 + jnp.tanh(0.7978845608028654 * (x + 0.044715 * x * x * x)))


# ------------------------------ fused kernel ---------------------------------
def fused_geneformer_kernel(
        ids_ref,                                            # (B*S, 1) int32
        mask_ref,                                           # (B, S) f32 attention mask
        word_ref, pos_ref, tok_ref, embg_ref, embb_ref,     # embedding tables + emb LN
        wqkv_ref, bqkv_ref,                                 # fused QKV, stacked [L, ...]
        wo_ref, bo_ref, ln1g_ref, ln1b_ref,
        w1_ref, b1_ref, w2_ref, b2_ref, ln2g_ref, ln2b_ref,
        poolw_ref, poolb_ref, clsw_ref, clsb_ref,           # head weights
        logits_ref):                                        # out: (B, NUM_LABELS)
    B, S, S1, SP, H = BATCH, SEQ, SEQ1, SEQ_PAD, HIDDEN
    NH, HD = NUM_HEADS, HEAD_DIM

    # ---- embeddings via one-hot MXU gather (no scalar-addressed loads) ----
    ids_col = ids_ref[...]                                               # (B*S, 1) int32
    iota = jax.lax.broadcasted_iota(jnp.int32, (B * S, VOCAB_PAD), 1)
    onehot = jnp.where(iota == ids_col, 1.0, 0.0)                        # (B*S, 128) f32
    word3 = jnp.dot(onehot, word_ref[...],
                    preferred_element_type=jnp.float32).reshape(B, S, H)
    pos = pos_ref[pl.ds(0, S), :]                                        # (S, H) broadcast
    tok0 = tok_ref[pl.ds(0, 1), :]                                       # (1, H) type id 0
    emb3 = _layer_norm(word3 + pos + tok0, embg_ref[...], embb_ref[...])  # (B, S, H)
    # embedding dropout: identity in eval

    # ---- prepend per-batch mean token, pad sequence 9 -> 16 (free reshapes) ----
    mean_tok = jnp.mean(emb3, axis=1, keepdims=True)                     # (B, 1, H)
    pad = jnp.zeros((B, SP - S1, H), jnp.float32)
    x2 = jnp.concatenate([mean_tok, emb3, pad], axis=1).reshape(B * SP, H)

    # ---- additive key mask: prepended token (mask 0, as in original) + pad rows ----
    m = jnp.concatenate([jnp.zeros((B, 1), jnp.float32),
                         mask_ref[...],
                         jnp.zeros((B, SP - S1), jnp.float32)], axis=1)   # (B, SP)
    bias = ((1.0 - m) * -10000.0)[:, None, :]                             # (B, 1, SP)
    bias_h = jnp.concatenate([bias] * NH, axis=0)                         # (NH*B, 1, SP)

    scale = 1.0 / math.sqrt(HD)

    def fold_heads(x2d, base):
        # (B*SP, :) lane slices -> (NH*B, SP, HD), head-major along the batch axis
        return jnp.concatenate(
            [x2d[:, base + h * HD: base + (h + 1) * HD].reshape(B, SP, HD)
             for h in range(NH)], axis=0)

    # ---- encoder layers (statically unrolled; all weights resident in VMEM) ----
    for l in range(NUM_LAYERS):
        qkv = jnp.dot(x2, wqkv_ref[l], preferred_element_type=jnp.float32) + bqkv_ref[l]
        qh = fold_heads(qkv, 0)                                           # (NH*B, SP, HD)
        kh = fold_heads(qkv, H)
        vh = fold_heads(qkv, 2 * H)

        s = jnp.einsum('bqd,bkd->bqk', qh, kh,
                       preferred_element_type=jnp.float32) * scale + bias_h
        s = s - jnp.max(s, axis=-1, keepdims=True)
        p = jnp.exp(s)
        p = p / jnp.sum(p, axis=-1, keepdims=True)                        # exact softmax
        ctx_h = jnp.einsum('bqk,bkd->bqd', p, vh, preferred_element_type=jnp.float32)
        ctx = jnp.concatenate([ctx_h[h * B:(h + 1) * B] for h in range(NH)],
                              axis=-1).reshape(B * SP, H)

        attn_out = jnp.dot(ctx, wo_ref[l], preferred_element_type=jnp.float32) + bo_ref[l]
        h1 = _layer_norm(attn_out + x2, ln1g_ref[l], ln1b_ref[l])

        ff = jnp.dot(h1, w1_ref[l], preferred_element_type=jnp.float32) + b1_ref[l]
        ff = _gelu(ff)
        ff = jnp.dot(ff, w2_ref[l], preferred_element_type=jnp.float32) + b2_ref[l]
        x2 = _layer_norm(ff + h1, ln2g_ref[l], ln2b_ref[l])

    # ---- CLS (row 0 per batch) -> pooler(tanh) -> dropout(identity) -> classifier ----
    cls = x2.reshape(B, SP, H)[:, 0, :]                                   # (B, H)
    pooled = jnp.tanh(jnp.dot(cls, poolw_ref[...], preferred_element_type=jnp.float32)
                      + poolb_ref[...])
    logits_ref[...] = (jnp.dot(pooled, clsw_ref[...], preferred_element_type=jnp.float32)
                       + clsb_ref[...]).astype(logits_ref.dtype)


# ------------------------------ wrapper ---------------------------------------
def geneformer_adaptor_forward(params, input_ids, attention_mask):
    B, S = input_ids.shape
    assert (B, S) == (BATCH, SEQ)

    ids_col = input_ids.reshape(B * S, 1).astype(jnp.int32)
    mask_f32 = attention_mask.astype(jnp.float32)

    # fuse QKV weights / biases along the output-feature axis (wrapper-side, cheap)
    wqkv = jnp.concatenate([params["wq"], params["wk"], params["wv"]], axis=-1)
    bqkv = jnp.concatenate([params["bq"], params["bk"], params["bv"]], axis=-1)
    # pad the vocab to one lane tile for the one-hot gather
    word_emb_p = jnp.pad(params["word_emb"],
                         ((0, VOCAB_PAD - VOCAB_SIZE), (0, 0)))

    tensor_inputs = (
        ids_col, mask_f32,
        word_emb_p, params["pos_emb"], params["tok_emb"],
        params["emb_ln_g"], params["emb_ln_b"],
        wqkv, bqkv, params["wo"], params["bo"],
        params["ln1_g"], params["ln1_b"],
        params["w1"], params["b1"], params["w2"], params["b2"],
        params["ln2_g"], params["ln2_b"],
        params["pool_w"], params["pool_b"], params["cls_w"], params["cls_b"],
    )

    def spec(shape):
        nd = len(shape)
        return pl.BlockSpec(shape, lambda i, nd=nd: (0,) * nd)

    in_specs = [spec(tuple(t.shape)) for t in tensor_inputs]

    flops = (
        2 * BATCH * SEQ * VOCAB_PAD * HIDDEN
        + NUM_LAYERS * (
            2 * BATCH * SEQ_PAD * HIDDEN * 3 * HIDDEN
            + 2 * 2 * NUM_HEADS * BATCH * SEQ_PAD * SEQ_PAD * HEAD_DIM
            + 2 * BATCH * SEQ_PAD * HIDDEN * HIDDEN
            + 2 * 2 * BATCH * SEQ_PAD * HIDDEN * INTERMEDIATE)
        + 2 * BATCH * HIDDEN * HIDDEN
        + 2 * BATCH * HIDDEN * NUM_LABELS)
    transcendentals = (
        NUM_LAYERS * (NUM_HEADS * BATCH * SEQ_PAD * SEQ_PAD
                      + BATCH * SEQ_PAD * INTERMEDIATE)
        + BATCH * HIDDEN)
    bytes_accessed = (sum(int(t.size) * t.dtype.itemsize for t in tensor_inputs)
                      + BATCH * NUM_LABELS * 4)

    return pl.pallas_call(
        fused_geneformer_kernel,
        out_shape=jax.ShapeDtypeStruct((B, NUM_LABELS), jnp.float32),
        grid=(1,),
        in_specs=in_specs,
        out_specs=pl.BlockSpec((B, NUM_LABELS), lambda i: (0, 0)),
        compiler_params=pltpu.CompilerParams(dimension_semantics=("arbitrary",)),
        cost_estimate=pl.CostEstimate(flops=flops, transcendentals=transcendentals,
                                      bytes_accessed=bytes_accessed),
    )(*tensor_inputs)


# ------------------------------ params init -----------------------------------
def init_params(key):
    def nrm(k, shape, scale=0.02):
        return scale * jax.random.normal(k, shape, dtype=jnp.float32)

    L, H, I = NUM_LAYERS, HIDDEN, INTERMEDIATE
    keys = jax.random.split(key, 11)
    params = {
        "word_emb": nrm(keys[0], (VOCAB_SIZE, H)),
        "pos_emb": nrm(keys[1], (MAX_POS, H)),
        "tok_emb": nrm(keys[2], (TYPE_VOCAB, H)),
        "emb_ln_g": jnp.ones((1, H), jnp.float32),
        "emb_ln_b": jnp.zeros((1, H), jnp.float32),
        "pool_w": nrm(keys[3], (H, H)),
        "pool_b": jnp.zeros((1, H), jnp.float32),
        "cls_w": nrm(keys[4], (H, NUM_LABELS)),
        "cls_b": jnp.zeros((1, NUM_LABELS), jnp.float32),
        # encoder layer weights stacked along a leading layer axis
        "wq": nrm(keys[5], (L, H, H)), "bq": jnp.zeros((L, 1, H), jnp.float32),
        "wk": nrm(keys[6], (L, H, H)), "bk": jnp.zeros((L, 1, H), jnp.float32),
        "wv": nrm(keys[7], (L, H, H)), "bv": jnp.zeros((L, 1, H), jnp.float32),
        "wo": nrm(keys[8], (L, H, H)), "bo": jnp.zeros((L, 1, H), jnp.float32),
        "ln1_g": jnp.ones((L, 1, H), jnp.float32),
        "ln1_b": jnp.zeros((L, 1, H), jnp.float32),
        "w1": nrm(keys[9], (L, H, I)), "b1": jnp.zeros((L, 1, I), jnp.float32),
        "w2": nrm(keys[10], (L, I, H)), "b2": jnp.zeros((L, 1, H), jnp.float32),
        "ln2_g": jnp.ones((L, 1, H), jnp.float32),
        "ln2_b": jnp.zeros((L, 1, H), jnp.float32),
    }
    return params


# --------------------------------- main ---------------------------------------
if __name__ == "__main__":
    key = jax.random.PRNGKey(0)
    pkey, ikey = jax.random.split(key)
    params = init_params(pkey)

    input_ids = jax.random.randint(ikey, (BATCH, SEQ), 0, VOCAB_SIZE, dtype=jnp.int32)
    attention_mask = jnp.ones((BATCH, SEQ), dtype=jnp.int32).at[1, SEQ - 1].set(0)

    logits = geneformer_adaptor_forward(params, input_ids, attention_mask)
    jax.block_until_ready(logits)
    assert logits.shape == (BATCH, NUM_LABELS) and logits.dtype == jnp.float32
    assert bool(jnp.all(jnp.isfinite(logits)))
    print("KERNEL_OK")
</pallas_src>

<mosaic_0001>
module attributes {stable_mosaic.version = 11 : i64} {
  func.func @fused_geneformer_kernel(%arg0: i32, %arg1: memref<16x1xi32, #tpu.memory_space<vmem>>, %arg2: memref<2x8xf32, #tpu.memory_space<vmem>>, %arg3: memref<128x32xf32, #tpu.memory_space<vmem>>, %arg4: memref<64x32xf32, #tpu.memory_space<vmem>>, %arg5: memref<2x32xf32, #tpu.memory_space<vmem>>, %arg6: memref<1x32xf32, #tpu.memory_space<vmem>>, %arg7: memref<1x32xf32, #tpu.memory_space<vmem>>, %arg8: memref<2x32x96xf32, #tpu.memory_space<vmem>>, %arg9: memref<2x1x96xf32, #tpu.memory_space<vmem>>, %arg10: memref<2x32x32xf32, #tpu.memory_space<vmem>>, %arg11: memref<2x1x32xf32, #tpu.memory_space<vmem>>, %arg12: memref<2x1x32xf32, #tpu.memory_space<vmem>>, %arg13: memref<2x1x32xf32, #tpu.memory_space<vmem>>, %arg14: memref<2x32x64xf32, #tpu.memory_space<vmem>>, %arg15: memref<2x1x64xf32, #tpu.memory_space<vmem>>, %arg16: memref<2x64x32xf32, #tpu.memory_space<vmem>>, %arg17: memref<2x1x32xf32, #tpu.memory_space<vmem>>, %arg18: memref<2x1x32xf32, #tpu.memory_space<vmem>>, %arg19: memref<2x1x32xf32, #tpu.memory_space<vmem>>, %arg20: memref<32x32xf32, #tpu.memory_space<vmem>>, %arg21: memref<1x32xf32, #tpu.memory_space<vmem>>, %arg22: memref<32x3xf32, #tpu.memory_space<vmem>>, %arg23: memref<1x3xf32, #tpu.memory_space<vmem>>, %arg24: memref<2x3xf32, #tpu.memory_space<vmem>>) attributes {dimension_semantics = [#tpu.dimension_semantics<arbitrary>], iteration_bounds = array<i64: 1>, scalar_prefetch = 0 : i64, scratch_operands = 0 : i64, tpu.core_type = #tpu.core_type<tc>, window_params = [{pipeline_mode = #tpu.pipeline_mode<synchronous>, transform_indices = @transform_0, window_bounds = array<i64: 16, 1>}, {pipeline_mode = #tpu.pipeline_mode<synchronous>, transform_indices = @transform_1, window_bounds = array<i64: 2, 8>}, {pipeline_mode = #tpu.pipeline_mode<synchronous>, transform_indices = @transform_2, window_bounds = array<i64: 128, 32>}, {pipeline_mode = #tpu.pipeline_mode<synchronous>, transform_indices = @transform_3, window_bounds = array<i64: 64, 32>}, {pipeline_mode = #tpu.pipeline_mode<synchronous>, transform_indices = @transform_4, window_bounds = array<i64: 2, 32>}, {pipeline_mode = #tpu.pipeline_mode<synchronous>, transform_indices = @transform_5, window_bounds = array<i64: 1, 32>}, {pipeline_mode = #tpu.pipeline_mode<synchronous>, transform_indices = @transform_6, window_bounds = array<i64: 1, 32>}, {pipeline_mode = #tpu.pipeline_mode<synchronous>, transform_indices = @transform_7, window_bounds = array<i64: 2, 32, 96>}, {pipeline_mode = #tpu.pipeline_mode<synchronous>, transform_indices = @transform_8, window_bounds = array<i64: 2, 1, 96>}, {pipeline_mode = #tpu.pipeline_mode<synchronous>, transform_indices = @transform_9, window_bounds = array<i64: 2, 32, 32>}, {pipeline_mode = #tpu.pipeline_mode<synchronous>, transform_indices = @transform_10, window_bounds = array<i64: 2, 1, 32>}, {pipeline_mode = #tpu.pipeline_mode<synchronous>, transform_indices = @transform_11, window_bounds = array<i64: 2, 1, 32>}, {pipeline_mode = #tpu.pipeline_mode<synchronous>, transform_indices = @transform_12, window_bounds = array<i64: 2, 1, 32>}, {pipeline_mode = #tpu.pipeline_mode<synchronous>, transform_indices = @transform_13, window_bounds = array<i64: 2, 32, 64>}, {pipeline_mode = #tpu.pipeline_mode<synchronous>, transform_indices = @transform_14, window_bounds = array<i64: 2, 1, 64>}, {pipeline_mode = #tpu.pipeline_mode<synchronous>, transform_indices = @transform_15, window_bounds = array<i64: 2, 64, 32>}, {pipeline_mode = #tpu.pipeline_mode<synchronous>, transform_indices = @transform_16, window_bounds = array<i64: 2, 1, 32>}, {pipeline_mode = #tpu.pipeline_mode<synchronous>, transform_indices = @transform_17, window_bounds = array<i64: 2, 1, 32>}, {pipeline_mode = #tpu.pipeline_mode<synchronous>, transform_indices = @transform_18, window_bounds = array<i64: 2, 1, 32>}, {pipeline_mode = #tpu.pipeline_mode<synchronous>, transform_indices = @transform_19, window_bounds = array<i64: 32, 32>}, {pipeline_mode = #tpu.pipeline_mode<synchronous>, transform_indices = @transform_20, window_bounds = array<i64: 1, 32>}, {pipeline_mode = #tpu.pipeline_mode<synchronous>, transform_indices = @transform_21, window_bounds = array<i64: 32, 3>}, {pipeline_mode = #tpu.pipeline_mode<synchronous>, transform_indices = @transform_22, window_bounds = array<i64: 1, 3>}, {pipeline_mode = #tpu.pipeline_mode<synchronous>, transform_indices = @transform_23, window_bounds = array<i64: 2, 3>}]} {
    %c0 = arith.constant 0 : index
    %c0_0 = arith.constant 0 : index
    %0 = vector.load %arg1[%c0, %c0_0] : memref<16x1xi32, #tpu.memory_space<vmem>>, vector<16x1xi32>
    %1 = tpu.iota {dimensions = array<i32: 1>} : vector<16x128xi32>
    %2 = vector.broadcast %0 : vector<16x1xi32> to vector<16x128xi32>
    %3 = arith.cmpi eq, %1, %2 : vector<16x128xi32>
    %cst = arith.constant 1.000000e+00 : f32
    %cst_1 = arith.constant 0.000000e+00 : f32
    %4 = vector.broadcast %cst : f32 to vector<16x128xf32>
    %5 = vector.broadcast %cst_1 : f32 to vector<16x128xf32>
    %6 = arith.select %3, %4, %5 : vector<16x128xi1>, vector<16x128xf32>
    %c0_2 = arith.constant 0 : index
    %c0_3 = arith.constant 0 : index
    %7 = vector.load %arg3[%c0_2, %c0_3] : memref<128x32xf32, #tpu.memory_space<vmem>>, vector<128x32xf32>
    %cst_4 = arith.constant dense<0.000000e+00> : vector<16x32xf32>
    %8 = tpu.matmul %6, %7, %cst_4 {dimension_numbers = #tpu.dot_dimension_numbers<[1], [0], [0], [1], [0, 0, 1, 1], [], []>} : vector<16x128xf32>, vector<128x32xf32>, vector<16x32xf32> -> vector<16x32xf32>
    %9 = vector.shape_cast %8 : vector<16x32xf32> to vector<2x8x32xf32>
    %c0_5 = arith.constant 0 : index
    %c0_6 = arith.constant 0 : index
    %10 = vector.load %arg4[%c0_5, %c0_6] : memref<64x32xf32, #tpu.memory_space<vmem>>, vector<8x32xf32>
    %c0_7 = arith.constant 0 : index
    %c0_8 = arith.constant 0 : index
    %11 = vector.load %arg5[%c0_7, %c0_8] : memref<2x32xf32, #tpu.memory_space<vmem>>, vector<1x32xf32>
    %12 = vector.shape_cast %10 : vector<8x32xf32> to vector<1x8x32xf32>
    %13 = vector.broadcast %12 : vector<1x8x32xf32> to vector<2x8x32xf32>
    %14 = arith.addf %9, %13 : vector<2x8x32xf32>
    %15 = vector.shape_cast %11 : vector<1x32xf32> to vector<1x1x32xf32>
    %16 = vector.broadcast %15 : vector<1x1x32xf32> to vector<2x8x32xf32>
    %17 = arith.addf %14, %16 : vector<2x8x32xf32>
    %c0_9 = arith.constant 0 : index
    %c0_10 = arith.constant 0 : index
    %18 = vector.load %arg6[%c0_9, %c0_10] : memref<1x32xf32, #tpu.memory_space<vmem>>, vector<1x32xf32>
    %c0_11 = arith.constant 0 : index
    %c0_12 = arith.constant 0 : index
    %19 = vector.load %arg7[%c0_11, %c0_12] : memref<1x32xf32, #tpu.memory_space<vmem>>, vector<1x32xf32>
    %cst_13 = arith.constant dense<0.000000e+00> : vector<2x8xf32>
    %20 = vector.multi_reduction <add>, %17, %cst_13 [2] : vector<2x8x32xf32> to vector<2x8xf32>
    %21 = vector.shape_cast %20 : vector<2x8xf32> to vector<2x8x1xf32>
    %cst_14 = arith.constant 3.200000e+01 : f32
    %22 = vector.broadcast %cst_14 : f32 to vector<2x8x1xf32>
    %23 = arith.divf %21, %22 : vector<2x8x1xf32>
    %24 = vector.broadcast %23 : vector<2x8x1xf32> to vector<2x8x32xf32>
    %25 = arith.subf %17, %24 : vector<2x8x32xf32>
    %26 = arith.mulf %25, %25 : vector<2x8x32xf32>
    %cst_15 = arith.constant dense<0.000000e+00> : vector<2x8xf32>
    %27 = vector.multi_reduction <add>, %26, %cst_15 [2] : vector<2x8x32xf32> to vector<2x8xf32>
    %28 = vector.shape_cast %27 : vector<2x8xf32> to vector<2x8x1xf32>
    %cst_16 = arith.constant 3.200000e+01 : f32
    %29 = vector.broadcast %cst_16 : f32 to vector<2x8x1xf32>
    %30 = arith.divf %28, %29 : vector<2x8x1xf32>
    %31 = vector.broadcast %23 : vector<2x8x1xf32> to vector<2x8x32xf32>
    %32 = arith.subf %17, %31 : vector<2x8x32xf32>
    %cst_17 = arith.constant 9.99999996E-13 : f32
    %33 = vector.broadcast %cst_17 : f32 to vector<2x8x1xf32>
    %34 = arith.addf %30, %33 : vector<2x8x1xf32>
    %35 = math.rsqrt %34 : vector<2x8x1xf32>
    %36 = vector.broadcast %35 : vector<2x8x1xf32> to vector<2x8x32xf32>
    %37 = arith.mulf %32, %36 : vector<2x8x32xf32>
    %38 = vector.shape_cast %18 : vector<1x32xf32> to vector<1x1x32xf32>
    %39 = vector.broadcast %38 : vector<1x1x32xf32> to vector<2x8x32xf32>
    %40 = arith.mulf %37, %39 : vector<2x8x32xf32>
    %41 = vector.shape_cast %19 : vector<1x32xf32> to vector<1x1x32xf32>
    %42 = vector.broadcast %41 : vector<1x1x32xf32> to vector<2x8x32xf32>
    %43 = arith.addf %40, %42 : vector<2x8x32xf32>
    %cst_18 = arith.constant dense<0.000000e+00> : vector<2x32xf32>
    %44 = vector.multi_reduction <add>, %43, %cst_18 [1] : vector<2x8x32xf32> to vector<2x32xf32>
    %45 = vector.shape_cast %44 : vector<2x32xf32> to vector<2x1x32xf32>
    %cst_19 = arith.constant 8.000000e+00 : f32
    %46 = vector.broadcast %cst_19 : f32 to vector<2x1x32xf32>
    %47 = arith.divf %45, %46 : vector<2x1x32xf32>
    %cst_20 = arith.constant 0.000000e+00 : f32
    %48 = vector.broadcast %cst_20 : f32 to vector<2x7x32xf32>
    %49 = tpu.concatenate %47, %43, %48 in 1 : vector<2x1x32xf32>, vector<2x8x32xf32>, vector<2x7x32xf32> -> vector<2x16x32xf32>
    %50 = vector.shape_cast %49 : vector<2x16x32xf32> to vector<32x32xf32>
    %cst_21 = arith.constant 0.000000e+00 : f32
    %51 = vector.broadcast %cst_21 : f32 to vector<2x1xf32>
    %c0_22 = arith.constant 0 : index
    %c0_23 = arith.constant 0 : index
    %52 = vector.load %arg2[%c0_22, %c0_23] : memref<2x8xf32, #tpu.memory_space<vmem>>, vector<2x8xf32>
    %cst_24 = arith.constant 0.000000e+00 : f32
    %53 = vector.broadcast %cst_24 : f32 to vector<2x7xf32>
    %54 = tpu.concatenate %51, %52, %53 in 1 : vector<2x1xf32>, vector<2x8xf32>, vector<2x7xf32> -> vector<2x16xf32>
    %cst_25 = arith.constant 1.000000e+00 : f32
    %55 = vector.broadcast %cst_25 : f32 to vector<2x16xf32>
    %56 = arith.subf %55, %54 : vector<2x16xf32>
    %cst_26 = arith.constant -1.000000e+04 : f32
    %57 = vector.broadcast %cst_26 : f32 to vector<2x16xf32>
    %58 = arith.mulf %56, %57 : vector<2x16xf32>
    %59 = vector.shape_cast %58 : vector<2x16xf32> to vector<2x1x16xf32>
    %60 = tpu.concatenate %59, %59 in 0 : vector<2x1x16xf32>, vector<2x1x16xf32> -> vector<4x1x16xf32>
    %c0_27 = arith.constant 0 : index
    %c0_28 = arith.constant 0 : index
    %c0_29 = arith.constant 0 : index
    %61 = vector.load %arg8[%c0_27, %c0_28, %c0_29] : memref<2x32x96xf32, #tpu.memory_space<vmem>>, vector<1x32x96xf32>
    %62 = vector.shape_cast %61 : vector<1x32x96xf32> to vector<32x96xf32>
    %cst_30 = arith.constant dense<0.000000e+00> : vector<32x96xf32>
    %63 = tpu.matmul %50, %62, %cst_30 {dimension_numbers = #tpu.dot_dimension_numbers<[1], [0], [0], [1], [0, 0, 1, 1], [], []>} : vector<32x32xf32>, vector<32x96xf32>, vector<32x96xf32> -> vector<32x96xf32>
    %c0_31 = arith.constant 0 : index
    %c0_32 = arith.constant 0 : index
    %c0_33 = arith.constant 0 : index
    %64 = vector.load %arg9[%c0_31, %c0_32, %c0_33] : memref<2x1x96xf32, #tpu.memory_space<vmem>>, vector<1x1x96xf32>
    %65 = vector.shape_cast %64 : vector<1x1x96xf32> to vector<1x96xf32>
    %66 = vector.broadcast %65 : vector<1x96xf32> to vector<32x96xf32>
    %67 = arith.addf %63, %66 : vector<32x96xf32>
    %68 = vector.extract_strided_slice %67 {offsets = [0, 0], sizes = [32, 16], strides = [1, 1]} : vector<32x96xf32> to vector<32x16xf32>
    %69 = vector.shape_cast %68 : vector<32x16xf32> to vector<2x16x16xf32>
    %70 = vector.extract_strided_slice %67 {offsets = [0, 16], sizes = [32, 16], strides = [1, 1]} : vector<32x96xf32> to vector<32x16xf32>
    %71 = vector.shape_cast %70 : vector<32x16xf32> to vector<2x16x16xf32>
    %72 = tpu.concatenate %69, %71 in 0 : vector<2x16x16xf32>, vector<2x16x16xf32> -> vector<4x16x16xf32>
    %73 = vector.extract_strided_slice %67 {offsets = [0, 32], sizes = [32, 16], strides = [1, 1]} : vector<32x96xf32> to vector<32x16xf32>
    %74 = vector.shape_cast %73 : vector<32x16xf32> to vector<2x16x16xf32>
    %75 = vector.extract_strided_slice %67 {offsets = [0, 48], sizes = [32, 16], strides = [1, 1]} : vector<32x96xf32> to vector<32x16xf32>
    %76 = vector.shape_cast %75 : vector<32x16xf32> to vector<2x16x16xf32>
    %77 = tpu.concatenate %74, %76 in 0 : vector<2x16x16xf32>, vector<2x16x16xf32> -> vector<4x16x16xf32>
    %78 = vector.extract_strided_slice %67 {offsets = [0, 64], sizes = [32, 16], strides = [1, 1]} : vector<32x96xf32> to vector<32x16xf32>
    %79 = vector.shape_cast %78 : vector<32x16xf32> to vector<2x16x16xf32>
    %80 = vector.extract_strided_slice %67 {offsets = [0, 80], sizes = [32, 16], strides = [1, 1]} : vector<32x96xf32> to vector<32x16xf32>
    %81 = vector.shape_cast %80 : vector<32x16xf32> to vector<2x16x16xf32>
    %82 = tpu.concatenate %79, %81 in 0 : vector<2x16x16xf32>, vector<2x16x16xf32> -> vector<4x16x16xf32>
    "tpu.trace_start"() <{level = 10 : i32, message = "bqd,bkd->bqk"}> : () -> ()
    %cst_34 = arith.constant dense<0.000000e+00> : vector<4x16x16xf32>
    %83 = tpu.matmul %72, %77, %cst_34 {dimension_numbers = #tpu.dot_dimension_numbers<[2], [2], [1], [1], [0, 0, 0, 1, 1, 1], [0], [0]>} : vector<4x16x16xf32>, vector<4x16x16xf32>, vector<4x16x16xf32> -> vector<4x16x16xf32>
    "tpu.trace_stop"() : () -> ()
    %cst_35 = arith.constant 2.500000e-01 : f32
    %84 = vector.broadcast %cst_35 : f32 to vector<4x16x16xf32>
    %85 = arith.mulf %83, %84 : vector<4x16x16xf32>
    %86 = vector.broadcast %60 : vector<4x1x16xf32> to vector<4x16x16xf32>
    %87 = arith.addf %85, %86 : vector<4x16x16xf32>
    %cst_36 = arith.constant dense<0xFF800000> : vector<4x16xf32>
    %88 = vector.multi_reduction <maximumf>, %87, %cst_36 [2] : vector<4x16x16xf32> to vector<4x16xf32>
    %89 = vector.shape_cast %88 : vector<4x16xf32> to vector<4x16x1xf32>
    %90 = vector.broadcast %89 : vector<4x16x1xf32> to vector<4x16x16xf32>
    %91 = arith.subf %87, %90 : vector<4x16x16xf32>
    %92 = math.exp %91 : vector<4x16x16xf32>
    %cst_37 = arith.constant dense<0.000000e+00> : vector<4x16xf32>
    %93 = vector.multi_reduction <add>, %92, %cst_37 [2] : vector<4x16x16xf32> to vector<4x16xf32>
    %94 = vector.shape_cast %93 : vector<4x16xf32> to vector<4x16x1xf32>
    %95 = vector.broadcast %94 : vector<4x16x1xf32> to vector<4x16x16xf32>
    %96 = arith.divf %92, %95 : vector<4x16x16xf32>
    "tpu.trace_start"() <{level = 10 : i32, message = "bqk,bkd->bqd"}> : () -> ()
    %cst_38 = arith.constant dense<0.000000e+00> : vector<4x16x16xf32>
    %97 = tpu.matmul %96, %82, %cst_38 {dimension_numbers = #tpu.dot_dimension_numbers<[2], [1], [1], [2], [0, 0, 0, 1, 1, 2], [0], [0]>} : vector<4x16x16xf32>, vector<4x16x16xf32>, vector<4x16x16xf32> -> vector<4x16x16xf32>
    "tpu.trace_stop"() : () -> ()
    %98 = vector.extract_strided_slice %97 {offsets = [0, 0, 0], sizes = [2, 16, 16], strides = [1, 1, 1]} : vector<4x16x16xf32> to vector<2x16x16xf32>
    %99 = vector.extract_strided_slice %97 {offsets = [2, 0, 0], sizes = [2, 16, 16], strides = [1, 1, 1]} : vector<4x16x16xf32> to vector<2x16x16xf32>
    %100 = tpu.concatenate %98, %99 in 2 : vector<2x16x16xf32>, vector<2x16x16xf32> -> vector<2x16x32xf32>
    %101 = vector.shape_cast %100 : vector<2x16x32xf32> to vector<32x32xf32>
    %c0_39 = arith.constant 0 : index
    %c0_40 = arith.constant 0 : index
    %c0_41 = arith.constant 0 : index
    %102 = vector.load %arg10[%c0_39, %c0_40, %c0_41] : memref<2x32x32xf32, #tpu.memory_space<vmem>>, vector<1x32x32xf32>
    %103 = vector.shape_cast %102 : vector<1x32x32xf32> to vector<32x32xf32>
    %cst_42 = arith.constant dense<0.000000e+00> : vector<32x32xf32>
    %104 = tpu.matmul %101, %103, %cst_42 {dimension_numbers = #tpu.dot_dimension_numbers<[1], [0], [0], [1], [0, 0, 1, 1], [], []>} : vector<32x32xf32>, vector<32x32xf32>, vector<32x32xf32> -> vector<32x32xf32>
    %c0_43 = arith.constant 0 : index
    %c0_44 = arith.constant 0 : index
    %c0_45 = arith.constant 0 : index
    %105 = vector.load %arg11[%c0_43, %c0_44, %c0_45] : memref<2x1x32xf32, #tpu.memory_space<vmem>>, vector<1x1x32xf32>
    %106 = vector.shape_cast %105 : vector<1x1x32xf32> to vector<1x32xf32>
    %107 = vector.broadcast %106 : vector<1x32xf32> to vector<32x32xf32>
    %108 = arith.addf %104, %107 : vector<32x32xf32>
    %109 = arith.addf %108, %50 : vector<32x32xf32>
    %c0_46 = arith.constant 0 : index
    %c0_47 = arith.constant 0 : index
    %c0_48 = arith.constant 0 : index
    %110 = vector.load %arg12[%c0_46, %c0_47, %c0_48] : memref<2x1x32xf32, #tpu.memory_space<vmem>>, vector<1x1x32xf32>
    %111 = vector.shape_cast %110 : vector<1x1x32xf32> to vector<1x32xf32>
    %c0_49 = arith.constant 0 : index
    %c0_50 = arith.constant 0 : index
    %c0_51 = arith.constant 0 : index
    %112 = vector.load %arg13[%c0_49, %c0_50, %c0_51] : memref<2x1x32xf32, #tpu.memory_space<vmem>>, vector<1x1x32xf32>
    %113 = vector.shape_cast %112 : vector<1x1x32xf32> to vector<1x32xf32>
    %cst_52 = arith.constant dense<0.000000e+00> : vector<32xf32>
    %114 = vector.multi_reduction <add>, %109, %cst_52 [1] : vector<32x32xf32> to vector<32xf32>
    %115 = vector.shape_cast %114 : vector<32xf32> to vector<32x1xf32>
    %cst_53 = arith.constant 3.200000e+01 : f32
    %116 = vector.broadcast %cst_53 : f32 to vector<32x1xf32>
    %117 = arith.divf %115, %116 : vector<32x1xf32>
    %118 = vector.broadcast %117 : vector<32x1xf32> to vector<32x32xf32>
    %119 = arith.subf %109, %118 : vector<32x32xf32>
    %120 = arith.mulf %119, %119 : vector<32x32xf32>
    %cst_54 = arith.constant dense<0.000000e+00> : vector<32xf32>
    %121 = vector.multi_reduction <add>, %120, %cst_54 [1] : vector<32x32xf32> to vector<32xf32>
    %122 = vector.shape_cast %121 : vector<32xf32> to vector<32x1xf32>
    %cst_55 = arith.constant 3.200000e+01 : f32
    %123 = vector.broadcast %cst_55 : f32 to vector<32x1xf32>
    %124 = arith.divf %122, %123 : vector<32x1xf32>
    %125 = vector.broadcast %117 : vector<32x1xf32> to vector<32x32xf32>
    %126 = arith.subf %109, %125 : vector<32x32xf32>
    %cst_56 = arith.constant 9.99999996E-13 : f32
    %127 = vector.broadcast %cst_56 : f32 to vector<32x1xf32>
    %128 = arith.addf %124, %127 : vector<32x1xf32>
    %129 = math.rsqrt %128 : vector<32x1xf32>
    %130 = vector.broadcast %129 : vector<32x1xf32> to vector<32x32xf32>
    %131 = arith.mulf %126, %130 : vector<32x32xf32>
    %132 = vector.broadcast %111 : vector<1x32xf32> to vector<32x32xf32>
    %133 = arith.mulf %131, %132 : vector<32x32xf32>
    %134 = vector.broadcast %113 : vector<1x32xf32> to vector<32x32xf32>
    %135 = arith.addf %133, %134 : vector<32x32xf32>
    %c0_57 = arith.constant 0 : index
    %c0_58 = arith.constant 0 : index
    %c0_59 = arith.constant 0 : index
    %136 = vector.load %arg14[%c0_57, %c0_58, %c0_59] : memref<2x32x64xf32, #tpu.memory_space<vmem>>, vector<1x32x64xf32>
    %137 = vector.shape_cast %136 : vector<1x32x64xf32> to vector<32x64xf32>
    %cst_60 = arith.constant dense<0.000000e+00> : vector<32x64xf32>
    %138 = tpu.matmul %135, %137, %cst_60 {dimension_numbers = #tpu.dot_dimension_numbers<[1], [0], [0], [1], [0, 0, 1, 1], [], []>} : vector<32x32xf32>, vector<32x64xf32>, vector<32x64xf32> -> vector<32x64xf32>
    %c0_61 = arith.constant 0 : index
    %c0_62 = arith.constant 0 : index
    %c0_63 = arith.constant 0 : index
    %139 = vector.load %arg15[%c0_61, %c0_62, %c0_63] : memref<2x1x64xf32, #tpu.memory_space<vmem>>, vector<1x1x64xf32>
    %140 = vector.shape_cast %139 : vector<1x1x64xf32> to vector<1x64xf32>
    %141 = vector.broadcast %140 : vector<1x64xf32> to vector<32x64xf32>
    %142 = arith.addf %138, %141 : vector<32x64xf32>
    %cst_64 = arith.constant 5.000000e-01 : f32
    %143 = vector.broadcast %cst_64 : f32 to vector<32x64xf32>
    %144 = arith.mulf %143, %142 : vector<32x64xf32>
    %cst_65 = arith.constant 4.471500e-02 : f32
    %145 = vector.broadcast %cst_65 : f32 to vector<32x64xf32>
    %146 = arith.mulf %145, %142 : vector<32x64xf32>
    %147 = arith.mulf %146, %142 : vector<32x64xf32>
    %148 = arith.mulf %147, %142 : vector<32x64xf32>
    %149 = arith.addf %142, %148 : vector<32x64xf32>
    %cst_66 = arith.constant 0.797884583 : f32
    %150 = vector.broadcast %cst_66 : f32 to vector<32x64xf32>
    %151 = arith.mulf %150, %149 : vector<32x64xf32>
    %152 = math.tanh %151 : vector<32x64xf32>
    %cst_67 = arith.constant 1.000000e+00 : f32
    %153 = vector.broadcast %cst_67 : f32 to vector<32x64xf32>
    %154 = arith.addf %153, %152 : vector<32x64xf32>
    %155 = arith.mulf %144, %154 : vector<32x64xf32>
    %c0_68 = arith.constant 0 : index
    %c0_69 = arith.constant 0 : index
    %c0_70 = arith.constant 0 : index
    %156 = vector.load %arg16[%c0_68, %c0_69, %c0_70] : memref<2x64x32xf32, #tpu.memory_space<vmem>>, vector<1x64x32xf32>
    %157 = vector.shape_cast %156 : vector<1x64x32xf32> to vector<64x32xf32>
    %cst_71 = arith.constant dense<0.000000e+00> : vector<32x32xf32>
    %158 = tpu.matmul %155, %157, %cst_71 {dimension_numbers = #tpu.dot_dimension_numbers<[1], [0], [0], [1], [0, 0, 1, 1], [], []>} : vector<32x64xf32>, vector<64x32xf32>, vector<32x32xf32> -> vector<32x32xf32>
    %c0_72 = arith.constant 0 : index
    %c0_73 = arith.constant 0 : index
    %c0_74 = arith.constant 0 : index
    %159 = vector.load %arg17[%c0_72, %c0_73, %c0_74] : memref<2x1x32xf32, #tpu.memory_space<vmem>>, vector<1x1x32xf32>
    %160 = vector.shape_cast %159 : vector<1x1x32xf32> to vector<1x32xf32>
    %161 = vector.broadcast %160 : vector<1x32xf32> to vector<32x32xf32>
    %162 = arith.addf %158, %161 : vector<32x32xf32>
    %163 = arith.addf %162, %135 : vector<32x32xf32>
    %c0_75 = arith.constant 0 : index
    %c0_76 = arith.constant 0 : index
    %c0_77 = arith.constant 0 : index
    %164 = vector.load %arg18[%c0_75, %c0_76, %c0_77] : memref<2x1x32xf32, #tpu.memory_space<vmem>>, vector<1x1x32xf32>
    %165 = vector.shape_cast %164 : vector<1x1x32xf32> to vector<1x32xf32>
    %c0_78 = arith.constant 0 : index
    %c0_79 = arith.constant 0 : index
    %c0_80 = arith.constant 0 : index
    %166 = vector.load %arg19[%c0_78, %c0_79, %c0_80] : memref<2x1x32xf32, #tpu.memory_space<vmem>>, vector<1x1x32xf32>
    %167 = vector.shape_cast %166 : vector<1x1x32xf32> to vector<1x32xf32>
    %cst_81 = arith.constant dense<0.000000e+00> : vector<32xf32>
    %168 = vector.multi_reduction <add>, %163, %cst_81 [1] : vector<32x32xf32> to vector<32xf32>
    %169 = vector.shape_cast %168 : vector<32xf32> to vector<32x1xf32>
    %cst_82 = arith.constant 3.200000e+01 : f32
    %170 = vector.broadcast %cst_82 : f32 to vector<32x1xf32>
    %171 = arith.divf %169, %170 : vector<32x1xf32>
    %172 = vector.broadcast %171 : vector<32x1xf32> to vector<32x32xf32>
    %173 = arith.subf %163, %172 : vector<32x32xf32>
    %174 = arith.mulf %173, %173 : vector<32x32xf32>
    %cst_83 = arith.constant dense<0.000000e+00> : vector<32xf32>
    %175 = vector.multi_reduction <add>, %174, %cst_83 [1] : vector<32x32xf32> to vector<32xf32>
    %176 = vector.shape_cast %175 : vector<32xf32> to vector<32x1xf32>
    %cst_84 = arith.constant 3.200000e+01 : f32
    %177 = vector.broadcast %cst_84 : f32 to vector<32x1xf32>
    %178 = arith.divf %176, %177 : vector<32x1xf32>
    %179 = vector.broadcast %171 : vector<32x1xf32> to vector<32x32xf32>
    %180 = arith.subf %163, %179 : vector<32x32xf32>
    %cst_85 = arith.constant 9.99999996E-13 : f32
    %181 = vector.broadcast %cst_85 : f32 to vector<32x1xf32>
    %182 = arith.addf %178, %181 : vector<32x1xf32>
    %183 = math.rsqrt %182 : vector<32x1xf32>
    %184 = vector.broadcast %183 : vector<32x1xf32> to vector<32x32xf32>
    %185 = arith.mulf %180, %184 : vector<32x32xf32>
    %186 = vector.broadcast %165 : vector<1x32xf32> to vector<32x32xf32>
    %187 = arith.mulf %185, %186 : vector<32x32xf32>
    %188 = vector.broadcast %167 : vector<1x32xf32> to vector<32x32xf32>
    %189 = arith.addf %187, %188 : vector<32x32xf32>
    %c1 = arith.constant 1 : index
    %c0_86 = arith.constant 0 : index
    %c0_87 = arith.constant 0 : index
    %190 = vector.load %arg8[%c1, %c0_86, %c0_87] : memref<2x32x96xf32, #tpu.memory_space<vmem>>, vector<1x32x96xf32>
    %191 = vector.shape_cast %190 : vector<1x32x96xf32> to vector<32x96xf32>
    %cst_88 = arith.constant dense<0.000000e+00> : vector<32x96xf32>
    %192 = tpu.matmul %189, %191, %cst_88 {dimension_numbers = #tpu.dot_dimension_numbers<[1], [0], [0], [1], [0, 0, 1, 1], [], []>} : vector<32x32xf32>, vector<32x96xf32>, vector<32x96xf32> -> vector<32x96xf32>
    %c1_89 = arith.constant 1 : index
    %c0_90 = arith.constant 0 : index
    %c0_91 = arith.constant 0 : index
    %193 = vector.load %arg9[%c1_89, %c0_90, %c0_91] : memref<2x1x96xf32, #tpu.memory_space<vmem>>, vector<1x1x96xf32>
    %194 = vector.shape_cast %193 : vector<1x1x96xf32> to vector<1x96xf32>
    %195 = vector.broadcast %194 : vector<1x96xf32> to vector<32x96xf32>
    %196 = arith.addf %192, %195 : vector<32x96xf32>
    %197 = vector.extract_strided_slice %196 {offsets = [0, 0], sizes = [32, 16], strides = [1, 1]} : vector<32x96xf32> to vector<32x16xf32>
    %198 = vector.shape_cast %197 : vector<32x16xf32> to vector<2x16x16xf32>
    %199 = vector.extract_strided_slice %196 {offsets = [0, 16], sizes = [32, 16], strides = [1, 1]} : vector<32x96xf32> to vector<32x16xf32>
    %200 = vector.shape_cast %199 : vector<32x16xf32> to vector<2x16x16xf32>
    %201 = tpu.concatenate %198, %200 in 0 : vector<2x16x16xf32>, vector<2x16x16xf32> -> vector<4x16x16xf32>
    %202 = vector.extract_strided_slice %196 {offsets = [0, 32], sizes = [32, 16], strides = [1, 1]} : vector<32x96xf32> to vector<32x16xf32>
    %203 = vector.shape_cast %202 : vector<32x16xf32> to vector<2x16x16xf32>
    %204 = vector.extract_strided_slice %196 {offsets = [0, 48], sizes = [32, 16], strides = [1, 1]} : vector<32x96xf32> to vector<32x16xf32>
    %205 = vector.shape_cast %204 : vector<32x16xf32> to vector<2x16x16xf32>
    %206 = tpu.concatenate %203, %205 in 0 : vector<2x16x16xf32>, vector<2x16x16xf32> -> vector<4x16x16xf32>
    %207 = vector.extract_strided_slice %196 {offsets = [0, 64], sizes = [32, 16], strides = [1, 1]} : vector<32x96xf32> to vector<32x16xf32>
    %208 = vector.shape_cast %207 : vector<32x16xf32> to vector<2x16x16xf32>
    %209 = vector.extract_strided_slice %196 {offsets = [0, 80], sizes = [32, 16], strides = [1, 1]} : vector<32x96xf32> to vector<32x16xf32>
    %210 = vector.shape_cast %209 : vector<32x16xf32> to vector<2x16x16xf32>
    %211 = tpu.concatenate %208, %210 in 0 : vector<2x16x16xf32>, vector<2x16x16xf32> -> vector<4x16x16xf32>
    "tpu.trace_start"() <{level = 10 : i32, message = "bqd,bkd->bqk"}> : () -> ()
    %cst_92 = arith.constant dense<0.000000e+00> : vector<4x16x16xf32>
    %212 = tpu.matmul %201, %206, %cst_92 {dimension_numbers = #tpu.dot_dimension_numbers<[2], [2], [1], [1], [0, 0, 0, 1, 1, 1], [0], [0]>} : vector<4x16x16xf32>, vector<4x16x16xf32>, vector<4x16x16xf32> -> vector<4x16x16xf32>
    "tpu.trace_stop"() : () -> ()
    %cst_93 = arith.constant 2.500000e-01 : f32
    %213 = vector.broadcast %cst_93 : f32 to vector<4x16x16xf32>
    %214 = arith.mulf %212, %213 : vector<4x16x16xf32>
    %215 = vector.broadcast %60 : vector<4x1x16xf32> to vector<4x16x16xf32>
    %216 = arith.addf %214, %215 : vector<4x16x16xf32>
    %cst_94 = arith.constant dense<0xFF800000> : vector<4x16xf32>
    %217 = vector.multi_reduction <maximumf>, %216, %cst_94 [2] : vector<4x16x16xf32> to vector<4x16xf32>
    %218 = vector.shape_cast %217 : vector<4x16xf32> to vector<4x16x1xf32>
    %219 = vector.broadcast %218 : vector<4x16x1xf32> to vector<4x16x16xf32>
    %220 = arith.subf %216, %219 : vector<4x16x16xf32>
    %221 = math.exp %220 : vector<4x16x16xf32>
    %cst_95 = arith.constant dense<0.000000e+00> : vector<4x16xf32>
    %222 = vector.multi_reduction <add>, %221, %cst_95 [2] : vector<4x16x16xf32> to vector<4x16xf32>
    %223 = vector.shape_cast %222 : vector<4x16xf32> to vector<4x16x1xf32>
    %224 = vector.broadcast %223 : vector<4x16x1xf32> to vector<4x16x16xf32>
    %225 = arith.divf %221, %224 : vector<4x16x16xf32>
    "tpu.trace_start"() <{level = 10 : i32, message = "bqk,bkd->bqd"}> : () -> ()
    %cst_96 = arith.constant dense<0.000000e+00> : vector<4x16x16xf32>
    %226 = tpu.matmul %225, %211, %cst_96 {dimension_numbers = #tpu.dot_dimension_numbers<[2], [1], [1], [2], [0, 0, 0, 1, 1, 2], [0], [0]>} : vector<4x16x16xf32>, vector<4x16x16xf32>, vector<4x16x16xf32> -> vector<4x16x16xf32>
    "tpu.trace_stop"() : () -> ()
    %227 = vector.extract_strided_slice %226 {offsets = [0, 0, 0], sizes = [2, 16, 16], strides = [1, 1, 1]} : vector<4x16x16xf32> to vector<2x16x16xf32>
    %228 = vector.extract_strided_slice %226 {offsets = [2, 0, 0], sizes = [2, 16, 16], strides = [1, 1, 1]} : vector<4x16x16xf32> to vector<2x16x16xf32>
    %229 = tpu.concatenate %227, %228 in 2 : vector<2x16x16xf32>, vector<2x16x16xf32> -> vector<2x16x32xf32>
    %230 = vector.shape_cast %229 : vector<2x16x32xf32> to vector<32x32xf32>
    %c1_97 = arith.constant 1 : index
    %c0_98 = arith.constant 0 : index
    %c0_99 = arith.constant 0 : index
    %231 = vector.load %arg10[%c1_97, %c0_98, %c0_99] : memref<2x32x32xf32, #tpu.memory_space<vmem>>, vector<1x32x32xf32>
    %232 = vector.shape_cast %231 : vector<1x32x32xf32> to vector<32x32xf32>
    %cst_100 = arith.constant dense<0.000000e+00> : vector<32x32xf32>
    %233 = tpu.matmul %230, %232, %cst_100 {dimension_numbers = #tpu.dot_dimension_numbers<[1], [0], [0], [1], [0, 0, 1, 1], [], []>} : vector<32x32xf32>, vector<32x32xf32>, vector<32x32xf32> -> vector<32x32xf32>
    %c1_101 = arith.constant 1 : index
    %c0_102 = arith.constant 0 : index
    %c0_103 = arith.constant 0 : index
    %234 = vector.load %arg11[%c1_101, %c0_102, %c0_103] : memref<2x1x32xf32, #tpu.memory_space<vmem>>, vector<1x1x32xf32>
    %235 = vector.shape_cast %234 : vector<1x1x32xf32> to vector<1x32xf32>
    %236 = vector.broadcast %235 : vector<1x32xf32> to vector<32x32xf32>
    %237 = arith.addf %233, %236 : vector<32x32xf32>
    %238 = arith.addf %237, %189 : vector<32x32xf32>
    %c1_104 = arith.constant 1 : index
    %c0_105 = arith.constant 0 : index
    %c0_106 = arith.constant 0 : index
    %239 = vector.load %arg12[%c1_104, %c0_105, %c0_106] : memref<2x1x32xf32, #tpu.memory_space<vmem>>, vector<1x1x32xf32>
    %240 = vector.shape_cast %239 : vector<1x1x32xf32> to vector<1x32xf32>
    %c1_107 = arith.constant 1 : index
    %c0_108 = arith.constant 0 : index
    %c0_109 = arith.constant 0 : index
    %241 = vector.load %arg13[%c1_107, %c0_108, %c0_109] : memref<2x1x32xf32, #tpu.memory_space<vmem>>, vector<1x1x32xf32>
    %242 = vector.shape_cast %241 : vector<1x1x32xf32> to vector<1x32xf32>
    %cst_110 = arith.constant dense<0.000000e+00> : vector<32xf32>
    %243 = vector.multi_reduction <add>, %238, %cst_110 [1] : vector<32x32xf32> to vector<32xf32>
    %244 = vector.shape_cast %243 : vector<32xf32> to vector<32x1xf32>
    %cst_111 = arith.constant 3.200000e+01 : f32
    %245 = vector.broadcast %cst_111 : f32 to vector<32x1xf32>
    %246 = arith.divf %244, %245 : vector<32x1xf32>
    %247 = vector.broadcast %246 : vector<32x1xf32> to vector<32x32xf32>
    %248 = arith.subf %238, %247 : vector<32x32xf32>
    %249 = arith.mulf %248, %248 : vector<32x32xf32>
    %cst_112 = arith.constant dense<0.000000e+00> : vector<32xf32>
    %250 = vector.multi_reduction <add>, %249, %cst_112 [1] : vector<32x32xf32> to vector<32xf32>
    %251 = vector.shape_cast %250 : vector<32xf32> to vector<32x1xf32>
    %cst_113 = arith.constant 3.200000e+01 : f32
    %252 = vector.broadcast %cst_113 : f32 to vector<32x1xf32>
    %253 = arith.divf %251, %252 : vector<32x1xf32>
    %254 = vector.broadcast %246 : vector<32x1xf32> to vector<32x32xf32>
    %255 = arith.subf %238, %254 : vector<32x32xf32>
    %cst_114 = arith.constant 9.99999996E-13 : f32
    %256 = vector.broadcast %cst_114 : f32 to vector<32x1xf32>
    %257 = arith.addf %253, %256 : vector<32x1xf32>
    %258 = math.rsqrt %257 : vector<32x1xf32>
    %259 = vector.broadcast %258 : vector<32x1xf32> to vector<32x32xf32>
    %260 = arith.mulf %255, %259 : vector<32x32xf32>
    %261 = vector.broadcast %240 : vector<1x32xf32> to vector<32x32xf32>
    %262 = arith.mulf %260, %261 : vector<32x32xf32>
    %263 = vector.broadcast %242 : vector<1x32xf32> to vector<32x32xf32>
    %264 = arith.addf %262, %263 : vector<32x32xf32>
    %c1_115 = arith.constant 1 : index
    %c0_116 = arith.constant 0 : index
    %c0_117 = arith.constant 0 : index
    %265 = vector.load %arg14[%c1_115, %c0_116, %c0_117] : memref<2x32x64xf32, #tpu.memory_space<vmem>>, vector<1x32x64xf32>
    %266 = vector.shape_cast %265 : vector<1x32x64xf32> to vector<32x64xf32>
    %cst_118 = arith.constant dense<0.000000e+00> : vector<32x64xf32>
    %267 = tpu.matmul %264, %266, %cst_118 {dimension_numbers = #tpu.dot_dimension_numbers<[1], [0], [0], [1], [0, 0, 1, 1], [], []>} : vector<32x32xf32>, vector<32x64xf32>, vector<32x64xf32> -> vector<32x64xf32>
    %c1_119 = arith.constant 1 : index
    %c0_120 = arith.constant 0 : index
    %c0_121 = arith.constant 0 : index
    %268 = vector.load %arg15[%c1_119, %c0_120, %c0_121] : memref<2x1x64xf32, #tpu.memory_space<vmem>>, vector<1x1x64xf32>
    %269 = vector.shape_cast %268 : vector<1x1x64xf32> to vector<1x64xf32>
    %270 = vector.broadcast %269 : vector<1x64xf32> to vector<32x64xf32>
    %271 = arith.addf %267, %270 : vector<32x64xf32>
    %cst_122 = arith.constant 5.000000e-01 : f32
    %272 = vector.broadcast %cst_122 : f32 to vector<32x64xf32>
    %273 = arith.mulf %272, %271 : vector<32x64xf32>
    %cst_123 = arith.constant 4.471500e-02 : f32
    %274 = vector.broadcast %cst_123 : f32 to vector<32x64xf32>
    %275 = arith.mulf %274, %271 : vector<32x64xf32>
    %276 = arith.mulf %275, %271 : vector<32x64xf32>
    %277 = arith.mulf %276, %271 : vector<32x64xf32>
    %278 = arith.addf %271, %277 : vector<32x64xf32>
    %cst_124 = arith.constant 0.797884583 : f32
    %279 = vector.broadcast %cst_124 : f32 to vector<32x64xf32>
    %280 = arith.mulf %279, %278 : vector<32x64xf32>
    %281 = math.tanh %280 : vector<32x64xf32>
    %cst_125 = arith.constant 1.000000e+00 : f32
    %282 = vector.broadcast %cst_125 : f32 to vector<32x64xf32>
    %283 = arith.addf %282, %281 : vector<32x64xf32>
    %284 = arith.mulf %273, %283 : vector<32x64xf32>
    %c1_126 = arith.constant 1 : index
    %c0_127 = arith.constant 0 : index
    %c0_128 = arith.constant 0 : index
    %285 = vector.load %arg16[%c1_126, %c0_127, %c0_128] : memref<2x64x32xf32, #tpu.memory_space<vmem>>, vector<1x64x32xf32>
    %286 = vector.shape_cast %285 : vector<1x64x32xf32> to vector<64x32xf32>
    %cst_129 = arith.constant dense<0.000000e+00> : vector<32x32xf32>
    %287 = tpu.matmul %284, %286, %cst_129 {dimension_numbers = #tpu.dot_dimension_numbers<[1], [0], [0], [1], [0, 0, 1, 1], [], []>} : vector<32x64xf32>, vector<64x32xf32>, vector<32x32xf32> -> vector<32x32xf32>
    %c1_130 = arith.constant 1 : index
    %c0_131 = arith.constant 0 : index
    %c0_132 = arith.constant 0 : index
    %288 = vector.load %arg17[%c1_130, %c0_131, %c0_132] : memref<2x1x32xf32, #tpu.memory_space<vmem>>, vector<1x1x32xf32>
    %289 = vector.shape_cast %288 : vector<1x1x32xf32> to vector<1x32xf32>
    %290 = vector.broadcast %289 : vector<1x32xf32> to vector<32x32xf32>
    %291 = arith.addf %287, %290 : vector<32x32xf32>
    %292 = arith.addf %291, %264 : vector<32x32xf32>
    %c1_133 = arith.constant 1 : index
    %c0_134 = arith.constant 0 : index
    %c0_135 = arith.constant 0 : index
    %293 = vector.load %arg18[%c1_133, %c0_134, %c0_135] : memref<2x1x32xf32, #tpu.memory_space<vmem>>, vector<1x1x32xf32>
    %294 = vector.shape_cast %293 : vector<1x1x32xf32> to vector<1x32xf32>
    %c1_136 = arith.constant 1 : index
    %c0_137 = arith.constant 0 : index
    %c0_138 = arith.constant 0 : index
    %295 = vector.load %arg19[%c1_136, %c0_137, %c0_138] : memref<2x1x32xf32, #tpu.memory_space<vmem>>, vector<1x1x32xf32>
    %296 = vector.shape_cast %295 : vector<1x1x32xf32> to vector<1x32xf32>
    %cst_139 = arith.constant dense<0.000000e+00> : vector<32xf32>
    %297 = vector.multi_reduction <add>, %292, %cst_139 [1] : vector<32x32xf32> to vector<32xf32>
    %298 = vector.shape_cast %297 : vector<32xf32> to vector<32x1xf32>
    %cst_140 = arith.constant 3.200000e+01 : f32
    %299 = vector.broadcast %cst_140 : f32 to vector<32x1xf32>
    %300 = arith.divf %298, %299 : vector<32x1xf32>
    %301 = vector.broadcast %300 : vector<32x1xf32> to vector<32x32xf32>
    %302 = arith.subf %292, %301 : vector<32x32xf32>
    %303 = arith.mulf %302, %302 : vector<32x32xf32>
    %cst_141 = arith.constant dense<0.000000e+00> : vector<32xf32>
    %304 = vector.multi_reduction <add>, %303, %cst_141 [1] : vector<32x32xf32> to vector<32xf32>
    %305 = vector.shape_cast %304 : vector<32xf32> to vector<32x1xf32>
    %cst_142 = arith.constant 3.200000e+01 : f32
    %306 = vector.broadcast %cst_142 : f32 to vector<32x1xf32>
    %307 = arith.divf %305, %306 : vector<32x1xf32>
    %308 = vector.broadcast %300 : vector<32x1xf32> to vector<32x32xf32>
    %309 = arith.subf %292, %308 : vector<32x32xf32>
    %cst_143 = arith.constant 9.99999996E-13 : f32
    %310 = vector.broadcast %cst_143 : f32 to vector<32x1xf32>
    %311 = arith.addf %307, %310 : vector<32x1xf32>
    %312 = math.rsqrt %311 : vector<32x1xf32>
    %313 = vector.broadcast %312 : vector<32x1xf32> to vector<32x32xf32>
    %314 = arith.mulf %309, %313 : vector<32x32xf32>
    %315 = vector.broadcast %294 : vector<1x32xf32> to vector<32x32xf32>
    %316 = arith.mulf %314, %315 : vector<32x32xf32>
    %317 = vector.broadcast %296 : vector<1x32xf32> to vector<32x32xf32>
    %318 = arith.addf %316, %317 : vector<32x32xf32>
    %319 = vector.shape_cast %318 : vector<32x32xf32> to vector<2x16x32xf32>
    %320 = vector.extract_strided_slice %319 {offsets = [0, 0, 0], sizes = [2, 1, 32], strides = [1, 1, 1]} : vector<2x16x32xf32> to vector<2x1x32xf32>
    %321 = vector.shape_cast %320 : vector<2x1x32xf32> to vector<2x32xf32>
    %c0_144 = arith.constant 0 : index
    %c0_145 = arith.constant 0 : index
    %322 = vector.load %arg20[%c0_144, %c0_145] : memref<32x32xf32, #tpu.memory_space<vmem>>, vector<32x32xf32>
    %cst_146 = arith.constant dense<0.000000e+00> : vector<2x32xf32>
    %323 = tpu.matmul %321, %322, %cst_146 {dimension_numbers = #tpu.dot_dimension_numbers<[1], [0], [0], [1], [0, 0, 1, 1], [], []>} : vector<2x32xf32>, vector<32x32xf32>, vector<2x32xf32> -> vector<2x32xf32>
    %c0_147 = arith.constant 0 : index
    %c0_148 = arith.constant 0 : index
    %324 = vector.load %arg21[%c0_147, %c0_148] : memref<1x32xf32, #tpu.memory_space<vmem>>, vector<1x32xf32>
    %325 = vector.broadcast %324 : vector<1x32xf32> to vector<2x32xf32>
    %326 = arith.addf %323, %325 : vector<2x32xf32>
    %327 = math.tanh %326 : vector<2x32xf32>
    %c0_149 = arith.constant 0 : index
    %c0_150 = arith.constant 0 : index
    %328 = vector.load %arg22[%c0_149, %c0_150] : memref<32x3xf32, #tpu.memory_space<vmem>>, vector<32x3xf32>
    %cst_151 = arith.constant dense<0.000000e+00> : vector<2x3xf32>
    %329 = tpu.matmul %327, %328, %cst_151 {dimension_numbers = #tpu.dot_dimension_numbers<[1], [0], [0], [1], [0, 0, 1, 1], [], []>} : vector<2x32xf32>, vector<32x3xf32>, vector<2x3xf32> -> vector<2x3xf32>
    %c0_152 = arith.constant 0 : index
    %c0_153 = arith.constant 0 : index
    %330 = vector.load %arg23[%c0_152, %c0_153] : memref<1x3xf32, #tpu.memory_space<vmem>>, vector<1x3xf32>
    %331 = vector.broadcast %330 : vector<1x3xf32> to vector<2x3xf32>
    %332 = arith.addf %329, %331 : vector<2x3xf32>
    %c0_154 = arith.constant 0 : index
    %c0_155 = arith.constant 0 : index
    %333 = vector.load %arg24[%c0_154, %c0_155] : memref<2x3xf32, #tpu.memory_space<vmem>>, vector<2x3xf32>
    tpu.vector_store %arg24[%c0_154, %c0_155], %332 {strides = array<i32>} : memref<2x3xf32, #tpu.memory_space<vmem>>, vector<2x3xf32>,
    return
  }
  func.func @transform_0(%arg0: i32) -> (i32, i32) {
    %c0_i32 = arith.constant 0 : i32
    %c0_i32_0 = arith.constant 0 : i32
    %c0_i32_1 = arith.constant 0 : i32
    return %c0_i32, %c0_i32_0 : i32, i32
  }
  func.func @transform_1(%arg0: i32) -> (i32, i32) {
    %c0_i32 = arith.constant 0 : i32
    %c0_i32_0 = arith.constant 0 : i32
    %c0_i32_1 = arith.constant 0 : i32
    return %c0_i32, %c0_i32_0 : i32, i32
  }
  func.func @transform_2(%arg0: i32) -> (i32, i32) {
    %c0_i32 = arith.constant 0 : i32
    %c0_i32_0 = arith.constant 0 : i32
    %c0_i32_1 = arith.constant 0 : i32
    return %c0_i32, %c0_i32_0 : i32, i32
  }
  func.func @transform_3(%arg0: i32) -> (i32, i32) {
    %c0_i32 = arith.constant 0 : i32
    %c0_i32_0 = arith.constant 0 : i32
    %c0_i32_1 = arith.constant 0 : i32
    return %c0_i32, %c0_i32_0 : i32, i32
  }
  func.func @transform_4(%arg0: i32) -> (i32, i32) {
    %c0_i32 = arith.constant 0 : i32
    %c0_i32_0 = arith.constant 0 : i32
    %c0_i32_1 = arith.constant 0 : i32
    return %c0_i32, %c0_i32_0 : i32, i32
  }
  func.func @transform_5(%arg0: i32) -> (i32, i32) {
    %c0_i32 = arith.constant 0 : i32
    %c0_i32_0 = arith.constant 0 : i32
    %c0_i32_1 = arith.constant 0 : i32
    return %c0_i32, %c0_i32_0 : i32, i32
  }
  func.func @transform_6(%arg0: i32) -> (i32, i32) {
    %c0_i32 = arith.constant 0 : i32
    %c0_i32_0 = arith.constant 0 : i32
    %c0_i32_1 = arith.constant 0 : i32
    return %c0_i32, %c0_i32_0 : i32, i32
  }
  func.func @transform_7(%arg0: i32) -> (i32, i32, i32) {
    %c0_i32 = arith.constant 0 : i32
    %c0_i32_0 = arith.constant 0 : i32
    %c0_i32_1 = arith.constant 0 : i32
    %c0_i32_2 = arith.constant 0 : i32
    return %c0_i32, %c0_i32_0, %c0_i32_1 : i32, i32, i32
  }
  func.func @transform_8(%arg0: i32) -> (i32, i32, i32) {
    %c0_i32 = arith.constant 0 : i32
    %c0_i32_0 = arith.constant 0 : i32
    %c0_i32_1 = arith.constant 0 : i32
    %c0_i32_2 = arith.constant 0 : i32
    return %c0_i32, %c0_i32_0, %c0_i32_1 : i32, i32, i32
  }
  func.func @transform_9(%arg0: i32) -> (i32, i32, i32) {
    %c0_i32 = arith.constant 0 : i32
    %c0_i32_0 = arith.constant 0 : i32
    %c0_i32_1 = arith.constant 0 : i32
    %c0_i32_2 = arith.constant 0 : i32
    return %c0_i32, %c0_i32_0, %c0_i32_1 : i32, i32, i32
  }
  func.func @transform_10(%arg0: i32) -> (i32, i32, i32) {
    %c0_i32 = arith.constant 0 : i32
    %c0_i32_0 = arith.constant 0 : i32
    %c0_i32_1 = arith.constant 0 : i32
    %c0_i32_2 = arith.constant 0 : i32
    return %c0_i32, %c0_i32_0, %c0_i32_1 : i32, i32, i32
  }
  func.func @transform_11(%arg0: i32) -> (i32, i32, i32) {
    %c0_i32 = arith.constant 0 : i32
    %c0_i32_0 = arith.constant 0 : i32
    %c0_i32_1 = arith.constant 0 : i32
    %c0_i32_2 = arith.constant 0 : i32
    return %c0_i32, %c0_i32_0, %c0_i32_1 : i32, i32, i32
  }
  func.func @transform_12(%arg0: i32) -> (i32, i32, i32) {
    %c0_i32 = arith.constant 0 : i32
    %c0_i32_0 = arith.constant 0 : i32
    %c0_i32_1 = arith.constant 0 : i32
    %c0_i32_2 = arith.constant 0 : i32
    return %c0_i32, %c0_i32_0, %c0_i32_1 : i32, i32, i32
  }
  func.func @transform_13(%arg0: i32) -> (i32, i32, i32) {
    %c0_i32 = arith.constant 0 : i32
    %c0_i32_0 = arith.constant 0 : i32
    %c0_i32_1 = arith.constant 0 : i32
    %c0_i32_2 = arith.constant 0 : i32
    return %c0_i32, %c0_i32_0, %c0_i32_1 : i32, i32, i32
  }
  func.func @transform_14(%arg0: i32) -> (i32, i32, i32) {
    %c0_i32 = arith.constant 0 : i32
    %c0_i32_0 = arith.constant 0 : i32
    %c0_i32_1 = arith.constant 0 : i32
    %c0_i32_2 = arith.constant 0 : i32
    return %c0_i32, %c0_i32_0, %c0_i32_1 : i32, i32, i32
  }
  func.func @transform_15(%arg0: i32) -> (i32, i32, i32) {
    %c0_i32 = arith.constant 0 : i32
    %c0_i32_0 = arith.constant 0 : i32
    %c0_i32_1 = arith.constant 0 : i32
    %c0_i32_2 = arith.constant 0 : i32
    return %c0_i32, %c0_i32_0, %c0_i32_1 : i32, i32, i32
  }
  func.func @transform_16(%arg0: i32) -> (i32, i32, i32) {
    %c0_i32 = arith.constant 0 : i32
    %c0_i32_0 = arith.constant 0 : i32
    %c0_i32_1 = arith.constant 0 : i32
    %c0_i32_2 = arith.constant 0 : i32
    return %c0_i32, %c0_i32_0, %c0_i32_1 : i32, i32, i32
  }
  func.func @transform_17(%arg0: i32) -> (i32, i32, i32) {
    %c0_i32 = arith.constant 0 : i32
    %c0_i32_0 = arith.constant 0 : i32
    %c0_i32_1 = arith.constant 0 : i32
    %c0_i32_2 = arith.constant 0 : i32
    return %c0_i32, %c0_i32_0, %c0_i32_1 : i32, i32, i32
  }
  func.func @transform_18(%arg0: i32) -> (i32, i32, i32) {
    %c0_i32 = arith.constant 0 : i32
    %c0_i32_0 = arith.constant 0 : i32
    %c0_i32_1 = arith.constant 0 : i32
    %c0_i32_2 = arith.constant 0 : i32
    return %c0_i32, %c0_i32_0, %c0_i32_1 : i32, i32, i32
  }
  func.func @transform_19(%arg0: i32) -> (i32, i32) {
    %c0_i32 = arith.constant 0 : i32
    %c0_i32_0 = arith.constant 0 : i32
    %c0_i32_1 = arith.constant 0 : i32
    return %c0_i32, %c0_i32_0 : i32, i32
  }
  func.func @transform_20(%arg0: i32) -> (i32, i32) {
    %c0_i32 = arith.constant 0 : i32
    %c0_i32_0 = arith.constant 0 : i32
    %c0_i32_1 = arith.constant 0 : i32
    return %c0_i32, %c0_i32_0 : i32, i32
  }
  func.func @transform_21(%arg0: i32) -> (i32, i32) {
    %c0_i32 = arith.constant 0 : i32
    %c0_i32_0 = arith.constant 0 : i32
    %c0_i32_1 = arith.constant 0 : i32
    return %c0_i32, %c0_i32_0 : i32, i32
  }
  func.func @transform_22(%arg0: i32) -> (i32, i32) {
    %c0_i32 = arith.constant 0 : i32
    %c0_i32_0 = arith.constant 0 : i32
    %c0_i32_1 = arith.constant 0 : i32
    return %c0_i32, %c0_i32_0 : i32, i32
  }
  func.func @transform_23(%arg0: i32) -> (i32, i32) {
    %c0_i32 = arith.constant 0 : i32
    %c0_i32_0 = arith.constant 0 : i32
    %c0_i32_1 = arith.constant 0 : i32
    return %c0_i32, %c0_i32_0 : i32, i32
  }
}

</mosaic_0001>

<llo_original>
// kernel: tpu_custom_call.1
$region0: #{tpu_custom_call.1}
  #allocation0 [shape = 'u32[]', space=smem, size = 0x4, offset = 0x4, fixed_abs, tag = 'smem constant byte address 0x4 - core index']
  #allocation1 [shape = 'u32[72,128]{1,0:T(1,128)}', space=vmem, size = 0x9000, scoped, tag = 'internal scratch']
  %s0 = inlined_call_operand.vmem [shape: s32[16,1], index: 0, kind: input, shape index: {}]
  %s1 = inlined_call_operand.vmem [shape: f32[2,8], index: 1, kind: input, shape index: {}]
  %s2 = inlined_call_operand.vmem [shape: f32[128,32], index: 2, kind: input, shape index: {}]
  %s3 = inlined_call_operand.vmem [shape: f32[64,32], index: 3, kind: input, shape index: {}]
  %s4 = inlined_call_operand.vmem [shape: f32[2,32], index: 4, kind: input, shape index: {}]
  %s5 = inlined_call_operand.vmem [shape: f32[1,32], index: 5, kind: input, shape index: {}]
  %s6 = inlined_call_operand.vmem [shape: f32[1,32], index: 6, kind: input, shape index: {}]
  %s7 = inlined_call_operand.vmem [shape: f32[2,32,96], index: 7, kind: input, shape index: {}]
  %s8 = inlined_call_operand.vmem [shape: f32[2,1,96], index: 8, kind: input, shape index: {}]
  %s9 = inlined_call_operand.vmem [shape: f32[2,32,32], index: 9, kind: input, shape index: {}]
  %s10 = inlined_call_operand.vmem [shape: f32[2,1,32], index: 10, kind: input, shape index: {}]
  %s11 = inlined_call_operand.vmem [shape: f32[2,1,32], index: 11, kind: input, shape index: {}]
  %s12 = inlined_call_operand.vmem [shape: f32[2,1,32], index: 12, kind: input, shape index: {}]
  %s13 = inlined_call_operand.vmem [shape: f32[2,32,64], index: 13, kind: input, shape index: {}]
  %s14 = inlined_call_operand.vmem [shape: f32[2,1,64], index: 14, kind: input, shape index: {}]
  %s15 = inlined_call_operand.vmem [shape: f32[2,64,32], index: 15, kind: input, shape index: {}]
  %s16 = inlined_call_operand.vmem [shape: f32[2,1,32], index: 16, kind: input, shape index: {}]
  %s17 = inlined_call_operand.vmem [shape: f32[2,1,32], index: 17, kind: input, shape index: {}]
  %s18 = inlined_call_operand.vmem [shape: f32[2,1,32], index: 18, kind: input, shape index: {}]
  %s19 = inlined_call_operand.vmem [shape: f32[32,32], index: 19, kind: input, shape index: {}]
  %s20 = inlined_call_operand.vmem [shape: f32[1,32], index: 20, kind: input, shape index: {}]
  %s21 = inlined_call_operand.vmem [shape: f32[32,3], index: 21, kind: input, shape index: {}]
  %s22 = inlined_call_operand.vmem [shape: f32[1,3], index: 22, kind: input, shape index: {}]
  %s23 = inlined_call_operand.hbm [shape: f32[2,3], index: 23, kind: output, shape index: {}]
  %s24 = sld [smem:[#allocation0]]
  $region102: #{tpu_custom_call.1} parent=0
    _
  %s26 = ssub.s32 1, %s24
  %s27 = scalar_select 0, %s26, %s24
  $region1: #{tpu_custom_call.1} parent=0
    #allocation2 [shape = 'u8[1024]{0}', space=vmem, size = 0x400, scoped, tag = 'output window, operand 0, single buffered']
    #allocation3 [shape = 's32[1]{0}', space=sflag, size = 0x4, scoped, tag = 'scoped memory for tpu_custom_call.1']
    %28 = vsyncpa [#allocation3], 0
    // Predicated region
    $region2: #{tpu_custom_call.1} parent=1 // pred_check
      _
    $region3: #{tpu_custom_call.1} parent=1 // pred_check_branch
      %30 = sbr.rel (0) target = $region5
    $region4: #{tpu_custom_call.1} parent=1 // pred_region
      _
    $region5: #{tpu_custom_call.1} parent=1 // pred_fallthru
      _
    // Predicated region
    $region6: #{tpu_custom_call.1} parent=1 // pred_check
      _
    $region7: #{tpu_custom_call.1} parent=1 // pred_check_branch
      %32 = sbr.rel (0) target = $region9
    $region8: #{tpu_custom_call.1} parent=1 // pred_region
      _
    $region9: #{tpu_custom_call.1} parent=1 // pred_fallthru
      _
    // Predicated region
    $region10: #{tpu_custom_call.1} parent=1 // pred_check
      _
    $region11: #{tpu_custom_call.1} parent=1 // pred_check_branch
      %34 = sbr.rel (0) target = $region13
    $region12: #{tpu_custom_call.1} parent=1 // pred_region
      _
    $region13: #{tpu_custom_call.1} parent=1 // pred_fallthru
      _
    // Predicated region
    $region14: #{tpu_custom_call.1} parent=1 // pred_check
      _
    $region15: #{tpu_custom_call.1} parent=1 // pred_check_branch
      %36 = sbr.rel (0) target = $region17
    $region16: #{tpu_custom_call.1} parent=1 // pred_region
      _
    $region17: #{tpu_custom_call.1} parent=1 // pred_fallthru
      _
    // Predicated region
    $region18: #{tpu_custom_call.1} parent=1 // pred_check
      _
    $region19: #{tpu_custom_call.1} parent=1 // pred_check_branch
      %38 = sbr.rel (0) target = $region21
    $region20: #{tpu_custom_call.1} parent=1 // pred_region
      _
    $region21: #{tpu_custom_call.1} parent=1 // pred_fallthru
      _
    // Predicated region
    $region22: #{tpu_custom_call.1} parent=1 // pred_check
      _
    $region23: #{tpu_custom_call.1} parent=1 // pred_check_branch
      %40 = sbr.rel (0) target = $region25
    $region24: #{tpu_custom_call.1} parent=1 // pred_region
      _
    $region25: #{tpu_custom_call.1} parent=1 // pred_fallthru
      _
    // Predicated region
    $region26: #{tpu_custom_call.1} parent=1 // pred_check
      _
    $region27: #{tpu_custom_call.1} parent=1 // pred_check_branch
      %42 = sbr.rel (0) target = $region29
    $region28: #{tpu_custom_call.1} parent=1 // pred_region
      _
    $region29: #{tpu_custom_call.1} parent=1 // pred_fallthru
      _
    // Predicated region
    $region30: #{tpu_custom_call.1} parent=1 // pred_check
      _
    $region31: #{tpu_custom_call.1} parent=1 // pred_check_branch
      %44 = sbr.rel (0) target = $region33
    $region32: #{tpu_custom_call.1} parent=1 // pred_region
      _
    $region33: #{tpu_custom_call.1} parent=1 // pred_fallthru
      _
    // Predicated region
    $region34: #{tpu_custom_call.1} parent=1 // pred_check
      _
    $region35: #{tpu_custom_call.1} parent=1 // pred_check_branch
      %46 = sbr.rel (0) target = $region37
    $region36: #{tpu_custom_call.1} parent=1 // pred_region
      _
    $region37: #{tpu_custom_call.1} parent=1 // pred_fallthru
      _
    // Predicated region
    $region38: #{tpu_custom_call.1} parent=1 // pred_check
      _
    $region39: #{tpu_custom_call.1} parent=1 // pred_check_branch
      %48 = sbr.rel (0) target = $region41
    $region40: #{tpu_custom_call.1} parent=1 // pred_region
      _
    $region41: #{tpu_custom_call.1} parent=1 // pred_fallthru
      _
    // Predicated region
    $region42: #{tpu_custom_call.1} parent=1 // pred_check
      _
    $region43: #{tpu_custom_call.1} parent=1 // pred_check_branch
      %50 = sbr.rel (0) target = $region45
    $region44: #{tpu_custom_call.1} parent=1 // pred_region
      _
    $region45: #{tpu_custom_call.1} parent=1 // pred_fallthru
      _
    // Predicated region
    $region46: #{tpu_custom_call.1} parent=1 // pred_check
      _
    $region47: #{tpu_custom_call.1} parent=1 // pred_check_branch
      %52 = sbr.rel (0) target = $region49
    $region48: #{tpu_custom_call.1} parent=1 // pred_region
      _
    $region49: #{tpu_custom_call.1} parent=1 // pred_fallthru
      _
    // Predicated region
    $region50: #{tpu_custom_call.1} parent=1 // pred_check
      _
    $region51: #{tpu_custom_call.1} parent=1 // pred_check_branch
      %54 = sbr.rel (0) target = $region53
    $region52: #{tpu_custom_call.1} parent=1 // pred_region
      _
    $region53: #{tpu_custom_call.1} parent=1 // pred_fallthru
      _
    // Predicated region
    $region54: #{tpu_custom_call.1} parent=1 // pred_check
      _
    $region55: #{tpu_custom_call.1} parent=1 // pred_check_branch
      %56 = sbr.rel (0) target = $region57
    $region56: #{tpu_custom_call.1} parent=1 // pred_region
      _
    $region57: #{tpu_custom_call.1} parent=1 // pred_fallthru
      _
    // Predicated region
    $region58: #{tpu_custom_call.1} parent=1 // pred_check
      _
    $region59: #{tpu_custom_call.1} parent=1 // pred_check_branch
      %58 = sbr.rel (0) target = $region61
    $region60: #{tpu_custom_call.1} parent=1 // pred_region
      _
    $region61: #{tpu_custom_call.1} parent=1 // pred_fallthru
      _
    // Predicated region
    $region62: #{tpu_custom_call.1} parent=1 // pred_check
      _
    $region63: #{tpu_custom_call.1} parent=1 // pred_check_branch
      %60 = sbr.rel (0) target = $region65
    $region64: #{tpu_custom_call.1} parent=1 // pred_region
      _
    $region65: #{tpu_custom_call.1} parent=1 // pred_fallthru
      _
    // Predicated region
    $region66: #{tpu_custom_call.1} parent=1 // pred_check
      _
    $region67: #{tpu_custom_call.1} parent=1 // pred_check_branch
      %62 = sbr.rel (0) target = $region69
    $region68: #{tpu_custom_call.1} parent=1 // pred_region
      _
    $region69: #{tpu_custom_call.1} parent=1 // pred_fallthru
      _
    // Predicated region
    $region70: #{tpu_custom_call.1} parent=1 // pred_check
      _
    $region71: #{tpu_custom_call.1} parent=1 // pred_check_branch
      %64 = sbr.rel (0) target = $region73
    $region72: #{tpu_custom_call.1} parent=1 // pred_region
      _
    $region73: #{tpu_custom_call.1} parent=1 // pred_fallthru
      _
    // Predicated region
    $region74: #{tpu_custom_call.1} parent=1 // pred_check
      _
    $region75: #{tpu_custom_call.1} parent=1 // pred_check_branch
      %66 = sbr.rel (0) target = $region77
    $region76: #{tpu_custom_call.1} parent=1 // pred_region
      _
    $region77: #{tpu_custom_call.1} parent=1 // pred_fallthru
      _
    // Predicated region
    $region78: #{tpu_custom_call.1} parent=1 // pred_check
      _
    $region79: #{tpu_custom_call.1} parent=1 // pred_check_branch
      %68 = sbr.rel (0) target = $region81
    $region80: #{tpu_custom_call.1} parent=1 // pred_region
      _
    $region81: #{tpu_custom_call.1} parent=1 // pred_fallthru
      _
    // Predicated region
    $region82: #{tpu_custom_call.1} parent=1 // pred_check
      _
    $region83: #{tpu_custom_call.1} parent=1 // pred_check_branch
      %70 = sbr.rel (0) target = $region85
    $region84: #{tpu_custom_call.1} parent=1 // pred_region
      _
    $region85: #{tpu_custom_call.1} parent=1 // pred_fallthru
      _
    // Predicated region
    $region86: #{tpu_custom_call.1} parent=1 // pred_check
      _
    $region87: #{tpu_custom_call.1} parent=1 // pred_check_branch
      %72 = sbr.rel (0) target = $region89
    $region88: #{tpu_custom_call.1} parent=1 // pred_region
      _
    $region89: #{tpu_custom_call.1} parent=1 // pred_fallthru
      _
    // Predicated region
    $region90: #{tpu_custom_call.1} parent=1 // pred_check
      _
    $region91: #{tpu_custom_call.1} parent=1 // pred_check_branch
      %74 = sbr.rel (0) target = $region93
    $region92: #{tpu_custom_call.1} parent=1 // pred_region
      _
    $region93: #{tpu_custom_call.1} parent=1 // pred_fallthru
      _
    %v75 = vld [vmem:[%s0] sm:$0xff]
    %v76 = vld [vmem:[%s0 + $0x8] sm:$0xff]
    %v77 = vlaneseq
    %v78 = vand.u32 %v77, 127
    %79 = vset.pattern.permute.xlu0 0
    %80 = vperm.xlu0 %79, %v75
    %v81 = vpop.permute.xlu0 %80
    %82 = vset.pattern.permute.xlu0 0
    %83 = vperm.xlu0 %82, %v76
    %v84 = vpop.permute.xlu0 %83
    %vm85 = vcmp.eq.s32.totalorder %v78, %v81
    %vm86 = vcmp.eq.s32.totalorder %v78, %v84
    %v87 = vsel %vm85, 1.0, 0.0
    %v88 = vsel %vm86, 1.0, 0.0
    %v89 = vld [vmem:[%s2] sm:$0xff]
    %v90 = vld [vmem:[%s2 + $0x8] sm:$0xff]
    %v91 = vld [vmem:[%s2 + $0x10] sm:$0xff]
    %v92 = vld [vmem:[%s2 + $0x18] sm:$0xff]
    %v93 = vld [vmem:[%s2 + $0x20] sm:$0xff]
    %v94 = vld [vmem:[%s2 + $0x28] sm:$0xff]
    %v95 = vld [vmem:[%s2 + $0x30] sm:$0xff]
    %v96 = vld [vmem:[%s2 + $0x38] sm:$0xff]
    %v97 = vld [vmem:[%s2 + $0x40] sm:$0xff]
    %v98 = vld [vmem:[%s2 + $0x48] sm:$0xff]
    %v99 = vld [vmem:[%s2 + $0x50] sm:$0xff]
    %v100 = vld [vmem:[%s2 + $0x58] sm:$0xff]
    %v101 = vld [vmem:[%s2 + $0x60] sm:$0xff]
    %v102 = vld [vmem:[%s2 + $0x68] sm:$0xff]
    %v103 = vld [vmem:[%s2 + $0x70] sm:$0xff]
    %v104 = vld [vmem:[%s2 + $0x78] sm:$0xff]
    %105 = vmatpush.msra.mxu0 %v104
    %106 = vmatpush.msra.mxu0 %v103
    %107 = vmatpush.msra.mxu0 %v102
    %108 = vmatpush.msra.mxu0 %v101
    %109 = vmatpush.msra.mxu0 %v100
    %110 = vmatpush.msra.mxu0 %v99
    %111 = vmatpush.msra.mxu0 %v98
    %112 = vmatpush.msra.mxu0 %v97
    %113 = vmatpush.msra.mxu0 %v96
    %114 = vmatpush.msra.mxu0 %v95
    %115 = vmatpush.msra.mxu0 %v94
    %116 = vmatpush.msra.mxu0 %v93
    %117 = vmatpush.msra.mxu0 %v92
    %118 = vmatpush.msra.mxu0 %v91
    %119 = vmatpush.msra.mxu0 %v90
    %120 = vmatpush.msra.mxu0 %v89
    %121 = vmatmul.f32.gmra.mxu0 %v87
    %v122 = vpop.f32.mrf.mxu0
    %v123 = vadd.f32 0.0, %v122
    %124 = vmatmul.f32.gmra.mxu0 %v88
    %v125 = vpop.f32.mrf.mxu0
    %v126 = vadd.f32 0.0, %v125
    %127 = vdwg.mxu0
    %v128 = vld [vmem:[%s3] sm:$0xff]
    %v129 = vld [vmem:[%s4] sm:$0x1]
    %v130 = vadd.f32 %v123, %v128
    %v131 = vadd.f32 %v126, %v128
    %v132 = vperm.slane %v129, 0
    %v133 = vadd.f32 %v130, %v132
    %v134 = vadd.f32 %v131, %v132
    %v135 = vld [vmem:[%s5] sm:$0x1]
    %v136 = vld [vmem:[%s6] sm:$0x1]
    %vm137 = vcmask 261120
    %v138 = vsel %vm137, %v133, 0.0
    %139 = vadd.xlane.f32.xlu0 %v138
    %v140 = vpop.xlane.xlu0 %139
    %v141 = vsel %vm137, %v134, 0.0
    %142 = vadd.xlane.f32.xlu0 %v141
    %v143 = vpop.xlane.xlu0 %142
    %v144 = vrcp.pop 32.0
    %v145 = vmul.f32 32.0, %v144
    %v146 = vsub.f32 1.0, %v145
    %v147 = vmul.f32 %v144, %v146
    %v148 = vadd.f32 %v144, %v147
    %vm149 = vweird.f32 %v144
    %v150 = vsel %vm149, %v144, %v148
    %v151 = vmul.f32 %v140, %v150
    %v152 = vmul.f32 %v143, %v150
    %v153 = vsub.f32 %v133, %v151
    %v154 = vsub.f32 %v134, %v152
    %v155 = vmul.f32 %v153, %v153
    %v156 = vmul.f32 %v154, %v154
    %v157 = vsel %vm137, %v155, 0.0
    %158 = vadd.xlane.f32.xlu0 %v157
    %v159 = vpop.xlane.xlu0 %158
    %v160 = vsel %vm137, %v156, 0.0
    %161 = vadd.xlane.f32.xlu0 %v160
    %v162 = vpop.xlane.xlu0 %161
    %v163 = vmul.f32 %v159, %v150
    %v164 = vmul.f32 %v162, %v150
    %v165 = vadd.f32 %v163, 1e-12
    %v166 = vadd.f32 %v164, 1e-12
    %v167 = vrsqrt.pop %v165
    %v168 = vmul.f32 %v167, %v165
    %v169 = vmul.f32 %v168, %v167
    %v170 = vmul.f32 0.5, %v169
    %v171 = vsub.f32 1.5, %v170
    %v172 = vmul.f32 %v167, %v171
    %vm173 = vweird.f32 %v165
    %vm174 = vweird.f32 %v167
    %vm175 = vmor %vm173, %vm174
    %v176 = vsel %vm175, %v167, %v172
    %v177 = vrsqrt.pop %v166
    %v178 = vmul.f32 %v177, %v166
    %v179 = vmul.f32 %v178, %v177
    %v180 = vmul.f32 0.5, %v179
    %v181 = vsub.f32 1.5, %v180
    %v182 = vmul.f32 %v177, %v181
    %vm183 = vweird.f32 %v166
    %vm184 = vweird.f32 %v177
    %vm185 = vmor %vm183, %vm184
    %v186 = vsel %vm185, %v177, %v182
    %v187 = vmul.f32 %v153, %v176
    %v188 = vmul.f32 %v154, %v186
    %v190 = vperm.slane %v135, 0
    %v192 = vmul.f32 %v187, %v190
    %v193 = vmul.f32 %v188, %v190
    %v195 = vperm.slane %v136, 0
    %v197 = vadd.f32 %v192, %v195
    %v198 = vadd.f32 %v193, %v195
    %v199 = vsel %vm137, %v197, 0.0
    %v200 = vrot.slane %v199, 4
    %v201 = vadd.f32 %v199, %v200
    %v202 = vrot.slane %v201, 2
    %v203 = vadd.f32 %v201, %v202
    %v204 = vrot.slane %v203, 1
    %v205 = vadd.f32 %v203, %v204
    %v206 = vsel %vm137, %v198, 0.0
    %v207 = vrot.slane %v206, 4
    %v208 = vadd.f32 %v206, %v207
    %v209 = vrot.slane %v208, 2
    %v210 = vadd.f32 %v208, %v209
    %v211 = vrot.slane %v210, 1
    %v212 = vadd.f32 %v210, %v211
    %v213 = vrcp.pop 8.0
    %v214 = vmul.f32 8.0, %v213
    %v215 = vsub.f32 1.0, %v214
    %v216 = vmul.f32 %v213, %v215
    %v217 = vadd.f32 %v213, %v216
    %vm218 = vweird.f32 %v213
    %v219 = vsel %vm218, %v213, %v217
    %v220 = vmul.f32 %v205, %v219
    %v221 = vmul.f32 %v212, %v219
    %v224 = vrot.slane %v197, 7
    %v225 = vrot.slane %v198, 7
    %vm228 = vcmask 1040384
    %v229 = vsel %vm228, %v220, %v224
    %v230 = vsel %vm228, %v221, %v225
    %v231 = vsel %vm228, %v224, 0.0
    %v232 = vsel %vm228, %v225, 0.0
    %v233 = vld [vmem:[%s1] sm:$0x3]
    %235 = vrot.lane.b32.xlu0 %v233, 1
    %v236 = vpop.permute.xlu0 %235
    %vm238 = vcmask 7168
    %v239 = vsel %vm238, 0.0, %v236
    %vm240 = vcmask 72704
    %v241 = vsel %vm240, %v239, 0.0
    %v242 = vsub.f32 1.0, %v241
    %v243 = vmul.f32 %v242, -10000.0
    %v245 = vrot.slane %v243, 1
    %v246 = vld [vmem:[%s7] sm:$0xff]
    %v247 = vld [vmem:[%s7 + $0x8] sm:$0xff]
    %v248 = vld [vmem:[%s7 + $0x10] sm:$0xff]
    %v249 = vld [vmem:[%s7 + $0x18] sm:$0xff]
    %v250 = vld [vmem:[%s8] sm:$0x1]
    %v252 = vperm.slane %v250, 0
    %v255 = vsel %vm137, %v229, 0
    %v258 = vsel %vm137, %v231, 0
    %v261 = vsel %vm137, %v230, 0
    %v264 = vsel %vm137, %v232, 0
    %266 = vmatpush.msra.mxu0 0.0
    %267 = vmatpush.msra.mxu0 0.0
    %268 = vmatpush.msra.mxu0 0.0
    %269 = vmatpush.msra.mxu0 0.0
    %270 = vmatpush.msra.mxu0 0.0
    %271 = vmatpush.msra.mxu0 0.0
    %272 = vmatpush.msra.mxu0 0.0
    %273 = vmatpush.msra.mxu0 0.0
    %274 = vmatpush.msra.mxu0 0.0
    %275 = vmatpush.msra.mxu0 0.0
    %276 = vmatpush.msra.mxu0 0.0
    %277 = vmatpush.msra.mxu0 0.0
    %278 = vmatpush.msra.mxu0 %v249
    %279 = vmatpush.msra.mxu0 %v248
    %280 = vmatpush.msra.mxu0 %v247
    %281 = vmatpush.msra.mxu0 %v246
    %282 = vmatmul.f32.gmra.mxu0 %v255
    %v283 = vpop.f32.mrf.mxu0
    %v284 = vadd.f32 %v252, %v283
    %285 = vmatmul.f32.gmra.mxu0 %v258
    %v286 = vpop.f32.mrf.mxu0
    %v287 = vadd.f32 %v252, %v286
    %288 = vmatmul.f32.gmra.mxu0 %v261
    %v289 = vpop.f32.mrf.mxu0
    %v290 = vadd.f32 %v252, %v289
    %291 = vmatmul.f32.gmra.mxu0 %v264
    %v292 = vpop.f32.mrf.mxu0
    %v293 = vadd.f32 %v252, %v292
    %294 = vdwg.mxu0
    %299 = vrot.lane.b32.xlu0 %v284, 112
    %v300 = vpop.permute.xlu0 %299
    %301 = vrot.lane.b32.xlu0 %v287, 112
    %v302 = vpop.permute.xlu0 %301
    %303 = vrot.lane.b32.xlu0 %v290, 112
    %v304 = vpop.permute.xlu0 %303
    %305 = vrot.lane.b32.xlu0 %v293, 112
    %v306 = vpop.permute.xlu0 %305
    %307 = vrot.lane.b32.xlu0 %v284, 96
    %v308 = vpop.permute.xlu0 %307
    %309 = vrot.lane.b32.xlu0 %v287, 96
    %v310 = vpop.permute.xlu0 %309
    %vm311 = vcmask 130048
    %v312 = vsel %vm311, %v284, 0
    %v314 = vsel %vm311, %v287, 0
    %v316 = vsel %vm311, %v308, 0
    %v318 = vsel %vm311, %v310, 0
    %320 = vmatpush.xpose.msra.mxu0 0.0
    %321 = vmatpush.xpose.msra.mxu0 0.0
    %322 = vmatpush.xpose.msra.mxu0 0.0
    %323 = vmatpush.xpose.msra.mxu0 0.0
    %324 = vmatpush.xpose.msra.mxu0 0.0
    %325 = vmatpush.xpose.msra.mxu0 0.0
    %326 = vmatpush.xpose.msra.mxu0 0.0
    %327 = vmatpush.xpose.msra.mxu0 0.0
    %328 = vmatpush.xpose.msra.mxu0 0.0
    %329 = vmatpush.xpose.msra.mxu0 0.0
    %330 = vmatpush.xpose.msra.mxu0 0.0
    %331 = vmatpush.xpose.msra.mxu0 0.0
    %332 = vmatpush.xpose.msra.mxu0 0.0
    %333 = vmatpush.xpose.msra.mxu0 0.0
    %334 = vmatpush.xpose.msra.mxu0 %v318
    %335 = vmatpush.xpose.msra.mxu0 %v316
    %336 = vmatmul.f32.gmra.mxu0 %v312
    %v337 = vpop.f32.mrf.mxu0
    %v338 = vadd.f32 0.0, %v337
    %339 = vmatmul.f32.gmra.mxu0 %v314
    %v340 = vpop.f32.mrf.mxu0
    %v341 = vadd.f32 0.0, %v340
    %342 = vdwg.mxu0
    %343 = vrot.lane.b32.xlu0 %v290, 96
    %v344 = vpop.permute.xlu0 %343
    %345 = vrot.lane.b32.xlu0 %v293, 96
    %v346 = vpop.permute.xlu0 %345
    %v347 = vsel %vm311, %v290, 0
    %v349 = vsel %vm311, %v293, 0
    %v351 = vsel %vm311, %v344, 0
    %v353 = vsel %vm311, %v346, 0
    %355 = vmatpush.xpose.msra.mxu0 0.0
    %356 = vmatpush.xpose.msra.mxu0 0.0
    %357 = vmatpush.xpose.msra.mxu0 0.0
    %358 = vmatpush.xpose.msra.mxu0 0.0
    %359 = vmatpush.xpose.msra.mxu0 0.0
    %360 = vmatpush.xpose.msra.mxu0 0.0
    %361 = vmatpush.xpose.msra.mxu0 0.0
    %362 = vmatpush.xpose.msra.mxu0 0.0
    %363 = vmatpush.xpose.msra.mxu0 0.0
    %364 = vmatpush.xpose.msra.mxu0 0.0
    %365 = vmatpush.xpose.msra.mxu0 0.0
    %366 = vmatpush.xpose.msra.mxu0 0.0
    %367 = vmatpush.xpose.msra.mxu0 0.0
    %368 = vmatpush.xpose.msra.mxu0 0.0
    %369 = vmatpush.xpose.msra.mxu0 %v353
    %370 = vmatpush.xpose.msra.mxu0 %v351
    %371 = vmatmul.f32.gmra.mxu0 %v347
    %v372 = vpop.f32.mrf.mxu0
    %v373 = vadd.f32 0.0, %v372
    %374 = vmatmul.f32.gmra.mxu0 %v349
    %v375 = vpop.f32.mrf.mxu0
    %v376 = vadd.f32 0.0, %v375
    %377 = vdwg.mxu0
    %378 = vrot.lane.b32.xlu0 %v300, 96
    %v379 = vpop.permute.xlu0 %378
    %380 = vrot.lane.b32.xlu0 %v302, 96
    %v381 = vpop.permute.xlu0 %380
    %v382 = vsel %vm311, %v300, 0
    %v384 = vsel %vm311, %v302, 0
    %v386 = vsel %vm311, %v379, 0
    %v388 = vsel %vm311, %v381, 0
    %390 = vmatpush.xpose.msra.mxu0 0.0
    %391 = vmatpush.xpose.msra.mxu0 0.0
    %392 = vmatpush.xpose.msra.mxu0 0.0
    %393 = vmatpush.xpose.msra.mxu0 0.0
    %394 = vmatpush.xpose.msra.mxu0 0.0
    %395 = vmatpush.xpose.msra.mxu0 0.0
    %396 = vmatpush.xpose.msra.mxu0 0.0
    %397 = vmatpush.xpose.msra.mxu0 0.0
    %398 = vmatpush.xpose.msra.mxu0 0.0
    %399 = vmatpush.xpose.msra.mxu0 0.0
    %400 = vmatpush.xpose.msra.mxu0 0.0
    %401 = vmatpush.xpose.msra.mxu0 0.0
    %402 = vmatpush.xpose.msra.mxu0 0.0
    %403 = vmatpush.xpose.msra.mxu0 0.0
    %404 = vmatpush.xpose.msra.mxu0 %v388
    %405 = vmatpush.xpose.msra.mxu0 %v386
    %406 = vmatmul.f32.gmra.mxu0 %v382
    %v407 = vpop.f32.mrf.mxu0
    %v408 = vadd.f32 0.0, %v407
    %409 = vmatmul.f32.gmra.mxu0 %v384
    %v410 = vpop.f32.mrf.mxu0
    %v411 = vadd.f32 0.0, %v410
    %412 = vdwg.mxu0
    %413 = vrot.lane.b32.xlu0 %v304, 96
    %v414 = vpop.permute.xlu0 %413
    %415 = vrot.lane.b32.xlu0 %v306, 96
    %v416 = vpop.permute.xlu0 %415
    %v417 = vsel %vm311, %v304, 0
    %v419 = vsel %vm311, %v306, 0
    %v421 = vsel %vm311, %v414, 0
    %v423 = vsel %vm311, %v416, 0
    %425 = vmatpush.xpose.msra.mxu0 0.0
    %426 = vmatpush.xpose.msra.mxu0 0.0
    %427 = vmatpush.xpose.msra.mxu0 0.0
    %428 = vmatpush.xpose.msra.mxu0 0.0
    %429 = vmatpush.xpose.msra.mxu0 0.0
    %430 = vmatpush.xpose.msra.mxu0 0.0
    %431 = vmatpush.xpose.msra.mxu0 0.0
    %432 = vmatpush.xpose.msra.mxu0 0.0
    %433 = vmatpush.xpose.msra.mxu0 0.0
    %434 = vmatpush.xpose.msra.mxu0 0.0
    %435 = vmatpush.xpose.msra.mxu0 0.0
    %436 = vmatpush.xpose.msra.mxu0 0.0
    %437 = vmatpush.xpose.msra.mxu0 0.0
    %438 = vmatpush.xpose.msra.mxu0 0.0
    %439 = vmatpush.xpose.msra.mxu0 %v423
    %440 = vmatpush.xpose.msra.mxu0 %v421
    %441 = vmatmul.f32.gmra.mxu0 %v417
    %v442 = vpop.f32.mrf.mxu0
    %v443 = vadd.f32 0.0, %v442
    %444 = vmatmul.f32.gmra.mxu0 %v419
    %v445 = vpop.f32.mrf.mxu0
    %v446 = vadd.f32 0.0, %v445
    %447 = vdwg.mxu0
    %v448 = vmul.f32 %v338, 0.25
    %v449 = vmul.f32 %v341, 0.25
    %v450 = vmul.f32 %v373, 0.25
    %v451 = vmul.f32 %v376, 0.25
    %v452 = vmul.f32 %v408, 0.25
    %v453 = vmul.f32 %v411, 0.25
    %v454 = vmul.f32 %v443, 0.25
    %v455 = vmul.f32 %v446, 0.25
    %v456 = vperm.slane %v243, 0
    %v457 = vperm.slane %v245, 0
    %v460 = vadd.f32 %v448, %v456
    %v461 = vadd.f32 %v449, %v456
    %v462 = vadd.f32 %v450, %v457
    %v463 = vadd.f32 %v451, %v457
    %v464 = vadd.f32 %v452, %v456
    %v465 = vadd.f32 %v453, %v456
    %v466 = vadd.f32 %v454, %v457
    %v467 = vadd.f32 %v455, %v457
    %v468 = vsel %vm311, %v460, -inf
    %469 = vmax.xlane.f32.xlu0 %v468
    %v470 = vpop.xlane.xlu0 %469
    %v471 = vsel %vm311, %v461, -inf
    %472 = vmax.xlane.f32.xlu0 %v471
    %v473 = vpop.xlane.xlu0 %472
    %v474 = vsel %vm311, %v462, -inf
    %475 = vmax.xlane.f32.xlu0 %v474
    %v476 = vpop.xlane.xlu0 %475
    %v477 = vsel %vm311, %v463, -inf
    %478 = vmax.xlane.f32.xlu0 %v477
    %v479 = vpop.xlane.xlu0 %478
    %v480 = vsel %vm311, %v464, -inf
    %481 = vmax.xlane.f32.xlu0 %v480
    %v482 = vpop.xlane.xlu0 %481
    %v483 = vsel %vm311, %v465, -inf
    %484 = vmax.xlane.f32.xlu0 %v483
    %v485 = vpop.xlane.xlu0 %484
    %v486 = vsel %vm311, %v466, -inf
    %487 = vmax.xlane.f32.xlu0 %v486
    %v488 = vpop.xlane.xlu0 %487
    %v489 = vsel %vm311, %v467, -inf
    %490 = vmax.xlane.f32.xlu0 %v489
    %v491 = vpop.xlane.xlu0 %490
    %v492 = vsub.f32 %v460, %v470
    %v493 = vsub.f32 %v461, %v473
    %v494 = vsub.f32 %v462, %v476
    %v495 = vsub.f32 %v463, %v479
    %v496 = vsub.f32 %v464, %v482
    %v497 = vsub.f32 %v465, %v485
    %v498 = vsub.f32 %v466, %v488
    %v499 = vsub.f32 %v467, %v491
    %v500 = vmul.f32 %v492, 1.442695
    %v501 = vpow.pop %v500
    %v502 = vmul.f32 %v493, 1.442695
    %v503 = vpow.pop %v502
    %v504 = vmul.f32 %v494, 1.442695
    %v505 = vpow.pop %v504
    %v506 = vmul.f32 %v495, 1.442695
    %v507 = vpow.pop %v506
    %v508 = vmul.f32 %v496, 1.442695
    %v509 = vpow.pop %v508
    %v510 = vmul.f32 %v497, 1.442695
    %v511 = vpow.pop %v510
    %v512 = vmul.f32 %v498, 1.442695
    %v513 = vpow.pop %v512
    %v514 = vmul.f32 %v499, 1.442695
    %v515 = vpow.pop %v514
    %v516 = vsel %vm311, %v501, 0.0
    %517 = vadd.xlane.f32.xlu0 %v516
    %v518 = vpop.xlane.xlu0 %517
    %v519 = vsel %vm311, %v503, 0.0
    %520 = vadd.xlane.f32.xlu0 %v519
    %v521 = vpop.xlane.xlu0 %520
    %v522 = vsel %vm311, %v505, 0.0
    %523 = vadd.xlane.f32.xlu0 %v522
    %v524 = vpop.xlane.xlu0 %523
    %v525 = vsel %vm311, %v507, 0.0
    %526 = vadd.xlane.f32.xlu0 %v525
    %v527 = vpop.xlane.xlu0 %526
    %v528 = vsel %vm311, %v509, 0.0
    %529 = vadd.xlane.f32.xlu0 %v528
    %v530 = vpop.xlane.xlu0 %529
    %v531 = vsel %vm311, %v511, 0.0
    %532 = vadd.xlane.f32.xlu0 %v531
    %v533 = vpop.xlane.xlu0 %532
    %v534 = vsel %vm311, %v513, 0.0
    %535 = vadd.xlane.f32.xlu0 %v534
    %v536 = vpop.xlane.xlu0 %535
    %v537 = vsel %vm311, %v515, 0.0
    %538 = vadd.xlane.f32.xlu0 %v537
    %v539 = vpop.xlane.xlu0 %538
    %v540 = vrcp.pop %v518
    %v541 = vmul.f32 %v518, %v540
    %v542 = vsub.f32 1.0, %v541
    %v543 = vmul.f32 %v540, %v542
    %v544 = vadd.f32 %v540, %v543
    %vm545 = vweird.f32 %v518
    %vm546 = vweird.f32 %v540
    %vm547 = vmor %vm545, %vm546
    %v548 = vsel %vm547, %v540, %v544
    %v549 = vand.u32 2147483647, %v518
    %vm550 = vcmp.eq.f32.partialorder %v549, 8.507059e+37
    %v551 = vand.u32 %v518, 2147483648
    %v552 = vor.u32 1.1754944e-38, %v551
    %v553 = vsel %vm550, %v552, %v548
    %v554 = vmul.f32 %v501, %v553
    %v555 = vrcp.pop %v521
    %v556 = vmul.f32 %v521, %v555
    %v557 = vsub.f32 1.0, %v556
    %v558 = vmul.f32 %v555, %v557
    %v559 = vadd.f32 %v555, %v558
    %vm560 = vweird.f32 %v521
    %vm561 = vweird.f32 %v555
    %vm562 = vmor %vm560, %vm561
    %v563 = vsel %vm562, %v555, %v559
    %v564 = vand.u32 2147483647, %v521
    %vm565 = vcmp.eq.f32.partialorder %v564, 8.507059e+37
    %v566 = vand.u32 %v521, 2147483648
    %v567 = vor.u32 1.1754944e-38, %v566
    %v568 = vsel %vm565, %v567, %v563
    %v569 = vmul.f32 %v503, %v568
    %v570 = vrcp.pop %v524
    %v571 = vmul.f32 %v524, %v570
    %v572 = vsub.f32 1.0, %v571
    %v573 = vmul.f32 %v570, %v572
    %v574 = vadd.f32 %v570, %v573
    %vm575 = vweird.f32 %v524
    %vm576 = vweird.f32 %v570
    %vm577 = vmor %vm575, %vm576
    %v578 = vsel %vm577, %v570, %v574
    %v579 = vand.u32 2147483647, %v524
    %vm580 = vcmp.eq.f32.partialorder %v579, 8.507059e+37
    %v581 = vand.u32 %v524, 2147483648
    %v582 = vor.u32 1.1754944e-38, %v581
    %v583 = vsel %vm580, %v582, %v578
    %v584 = vmul.f32 %v505, %v583
    %v585 = vrcp.pop %v527
    %v586 = vmul.f32 %v527, %v585
    %v587 = vsub.f32 1.0, %v586
    %v588 = vmul.f32 %v585, %v587
    %v589 = vadd.f32 %v585, %v588
    %vm590 = vweird.f32 %v527
    %vm591 = vweird.f32 %v585
    %vm592 = vmor %vm590, %vm591
    %v593 = vsel %vm592, %v585, %v589
    %v594 = vand.u32 2147483647, %v527
    %vm595 = vcmp.eq.f32.partialorder %v594, 8.507059e+37
    %v596 = vand.u32 %v527, 2147483648
    %v597 = vor.u32 1.1754944e-38, %v596
    %v598 = vsel %vm595, %v597, %v593
    %v599 = vmul.f32 %v507, %v598
    %v600 = vrcp.pop %v530
    %v601 = vmul.f32 %v530, %v600
    %v602 = vsub.f32 1.0, %v601
    %v603 = vmul.f32 %v600, %v602
    %v604 = vadd.f32 %v600, %v603
    %vm605 = vweird.f32 %v530
    %vm606 = vweird.f32 %v600
    %vm607 = vmor %vm605, %vm606
    %v608 = vsel %vm607, %v600, %v604
    %v609 = vand.u32 2147483647, %v530
    %vm610 = vcmp.eq.f32.partialorder %v609, 8.507059e+37
    %v611 = vand.u32 %v530, 2147483648
    %v612 = vor.u32 1.1754944e-38, %v611
    %v613 = vsel %vm610, %v612, %v608
    %v614 = vmul.f32 %v509, %v613
    %v615 = vrcp.pop %v533
    %v616 = vmul.f32 %v533, %v615
    %v617 = vsub.f32 1.0, %v616
    %v618 = vmul.f32 %v615, %v617
    %v619 = vadd.f32 %v615, %v618
    %vm620 = vweird.f32 %v533
    %vm621 = vweird.f32 %v615
    %vm622 = vmor %vm620, %vm621
    %v623 = vsel %vm622, %v615, %v619
    %v624 = vand.u32 2147483647, %v533
    %vm625 = vcmp.eq.f32.partialorder %v624, 8.507059e+37
    %v626 = vand.u32 %v533, 2147483648
    %v627 = vor.u32 1.1754944e-38, %v626
    %v628 = vsel %vm625, %v627, %v623
    %v629 = vmul.f32 %v511, %v628
    %v630 = vrcp.pop %v536
    %v631 = vmul.f32 %v536, %v630
    %v632 = vsub.f32 1.0, %v631
    %v633 = vmul.f32 %v630, %v632
    %v634 = vadd.f32 %v630, %v633
    %vm635 = vweird.f32 %v536
    %vm636 = vweird.f32 %v630
    %vm637 = vmor %vm635, %vm636
    %v638 = vsel %vm637, %v630, %v634
    %v639 = vand.u32 2147483647, %v536
    %vm640 = vcmp.eq.f32.partialorder %v639, 8.507059e+37
    %v641 = vand.u32 %v536, 2147483648
    %v642 = vor.u32 1.1754944e-38, %v641
    %v643 = vsel %vm640, %v642, %v638
    %v644 = vmul.f32 %v513, %v643
    %v645 = vrcp.pop %v539
    %v646 = vmul.f32 %v539, %v645
    %v647 = vsub.f32 1.0, %v646
    %v648 = vmul.f32 %v645, %v647
    %v649 = vadd.f32 %v645, %v648
    %vm650 = vweird.f32 %v539
    %vm651 = vweird.f32 %v645
    %vm652 = vmor %vm650, %vm651
    %v653 = vsel %vm652, %v645, %v649
    %v654 = vand.u32 2147483647, %v539
    %vm655 = vcmp.eq.f32.partialorder %v654, 8.507059e+37
    %v656 = vand.u32 %v539, 2147483648
    %v657 = vor.u32 1.1754944e-38, %v656
    %v658 = vsel %vm655, %v657, %v653
    %v659 = vmul.f32 %v515, %v658
    %660 = vrot.lane.b32.xlu0 %v284, 64
    %v661 = vpop.permute.xlu0 %660
    %662 = vrot.lane.b32.xlu0 %v287, 64
    %v663 = vpop.permute.xlu0 %662
    %v667 = vsel %vm311, %v554, 0
    %v670 = vsel %vm311, %v569, 0
    %672 = vmatpush.msra.mxu0 0.0
    %673 = vmatpush.msra.mxu0 0.0
    %674 = vmatpush.msra.mxu0 0.0
    %675 = vmatpush.msra.mxu0 0.0
    %676 = vmatpush.msra.mxu0 0.0
    %677 = vmatpush.msra.mxu0 0.0
    %678 = vmatpush.msra.mxu0 0.0
    %679 = vmatpush.msra.mxu0 0.0
    %680 = vmatpush.msra.mxu0 0.0
    %681 = vmatpush.msra.mxu0 0.0
    %682 = vmatpush.msra.mxu0 0.0
    %683 = vmatpush.msra.mxu0 0.0
    %684 = vmatpush.msra.mxu0 0.0
    %685 = vmatpush.msra.mxu0 0.0
    %686 = vmatpush.msra.mxu0 %v663
    %687 = vmatpush.msra.mxu0 %v661
    %688 = vmatmul.f32.gmra.mxu0 %v667
    %v689 = vpop.f32.mrf.mxu0
    %v690 = vadd.f32 0.0, %v689
    %691 = vmatmul.f32.gmra.mxu0 %v670
    %v692 = vpop.f32.mrf.mxu0
    %v693 = vadd.f32 0.0, %v692
    %694 = vdwg.mxu0
    %695 = vrot.lane.b32.xlu0 %v290, 64
    %v696 = vpop.permute.xlu0 %695
    %697 = vrot.lane.b32.xlu0 %v293, 64
    %v698 = vpop.permute.xlu0 %697
    %v702 = vsel %vm311, %v584, 0
    %v705 = vsel %vm311, %v599, 0
    %707 = vmatpush.msra.mxu0 0.0
    %708 = vmatpush.msra.mxu0 0.0
    %709 = vmatpush.msra.mxu0 0.0
    %710 = vmatpush.msra.mxu0 0.0
    %711 = vmatpush.msra.mxu0 0.0
    %712 = vmatpush.msra.mxu0 0.0
    %713 = vmatpush.msra.mxu0 0.0
    %714 = vmatpush.msra.mxu0 0.0
    %715 = vmatpush.msra.mxu0 0.0
    %716 = vmatpush.msra.mxu0 0.0
    %717 = vmatpush.msra.mxu0 0.0
    %718 = vmatpush.msra.mxu0 0.0
    %719 = vmatpush.msra.mxu0 0.0
    %720 = vmatpush.msra.mxu0 0.0
    %721 = vmatpush.msra.mxu0 %v698
    %722 = vmatpush.msra.mxu0 %v696
    %723 = vmatmul.f32.gmra.mxu0 %v702
    %v724 = vpop.f32.mrf.mxu0
    %v725 = vadd.f32 0.0, %v724
    %726 = vmatmul.f32.gmra.mxu0 %v705
    %v727 = vpop.f32.mrf.mxu0
    %v728 = vadd.f32 0.0, %v727
    %729 = vdwg.mxu0
    %730 = vrot.lane.b32.xlu0 %v300, 64
    %v731 = vpop.permute.xlu0 %730
    %732 = vrot.lane.b32.xlu0 %v302, 64
    %v733 = vpop.permute.xlu0 %732
    %v737 = vsel %vm311, %v614, 0
    %v740 = vsel %vm311, %v629, 0
    %742 = vmatpush.msra.mxu0 0.0
    %743 = vmatpush.msra.mxu0 0.0
    %744 = vmatpush.msra.mxu0 0.0
    %745 = vmatpush.msra.mxu0 0.0
    %746 = vmatpush.msra.mxu0 0.0
    %747 = vmatpush.msra.mxu0 0.0
    %748 = vmatpush.msra.mxu0 0.0
    %749 = vmatpush.msra.mxu0 0.0
    %750 = vmatpush.msra.mxu0 0.0
    %751 = vmatpush.msra.mxu0 0.0
    %752 = vmatpush.msra.mxu0 0.0
    %753 = vmatpush.msra.mxu0 0.0
    %754 = vmatpush.msra.mxu0 0.0
    %755 = vmatpush.msra.mxu0 0.0
    %756 = vmatpush.msra.mxu0 %v733
    %757 = vmatpush.msra.mxu0 %v731
    %758 = vmatmul.f32.gmra.mxu0 %v737
    %v759 = vpop.f32.mrf.mxu0
    %v760 = vadd.f32 0.0, %v759
    %761 = vmatmul.f32.gmra.mxu0 %v740
    %v762 = vpop.f32.mrf.mxu0
    %v763 = vadd.f32 0.0, %v762
    %764 = vdwg.mxu0
    %765 = vrot.lane.b32.xlu0 %v304, 64
    %v766 = vpop.permute.xlu0 %765
    %767 = vrot.lane.b32.xlu0 %v306, 64
    %v768 = vpop.permute.xlu0 %767
    %v772 = vsel %vm311, %v644, 0
    %v775 = vsel %vm311, %v659, 0
    %777 = vmatpush.msra.mxu0 0.0
    %778 = vmatpush.msra.mxu0 0.0
    %779 = vmatpush.msra.mxu0 0.0
    %780 = vmatpush.msra.mxu0 0.0
    %781 = vmatpush.msra.mxu0 0.0
    %782 = vmatpush.msra.mxu0 0.0
    %783 = vmatpush.msra.mxu0 0.0
    %784 = vmatpush.msra.mxu0 0.0
    %785 = vmatpush.msra.mxu0 0.0
    %786 = vmatpush.msra.mxu0 0.0
    %787 = vmatpush.msra.mxu0 0.0
    %788 = vmatpush.msra.mxu0 0.0
    %789 = vmatpush.msra.mxu0 0.0
    %790 = vmatpush.msra.mxu0 0.0
    %791 = vmatpush.msra.mxu0 %v768
    %792 = vmatpush.msra.mxu0 %v766
    %793 = vmatmul.f32.gmra.mxu0 %v772
    %v794 = vpop.f32.mrf.mxu0
    %v795 = vadd.f32 0.0, %v794
    %796 = vmatmul.f32.gmra.mxu0 %v775
    %v797 = vpop.f32.mrf.mxu0
    %v798 = vadd.f32 0.0, %v797
    %799 = vdwg.mxu0
    %804 = vrot.lane.b32.xlu0 %v760, 16
    %v805 = vpop.permute.xlu0 %804
    %806 = vrot.lane.b32.xlu0 %v763, 16
    %v807 = vpop.permute.xlu0 %806
    %808 = vrot.lane.b32.xlu0 %v795, 16
    %v809 = vpop.permute.xlu0 %808
    %810 = vrot.lane.b32.xlu0 %v798, 16
    %v811 = vpop.permute.xlu0 %810
    %v816 = vsel %vm311, %v690, %v805
    %v817 = vsel %vm311, %v693, %v807
    %v818 = vsel %vm311, %v725, %v809
    %v819 = vsel %vm311, %v728, %v811
    %v820 = vld [vmem:[%s9] sm:$0xff]
    %v821 = vld [vmem:[%s9 + $0x8] sm:$0xff]
    %v822 = vld [vmem:[%s9 + $0x10] sm:$0xff]
    %v823 = vld [vmem:[%s9 + $0x18] sm:$0xff]
    %v824 = vld [vmem:[%s10] sm:$0x1]
    %v826 = vperm.slane %v824, 0
    %v829 = vsel %vm137, %v816, 0
    %v832 = vsel %vm137, %v817, 0
    %v835 = vsel %vm137, %v818, 0
    %v838 = vsel %vm137, %v819, 0
    %840 = vmatpush.msra.mxu0 0.0
    %841 = vmatpush.msra.mxu0 0.0
    %842 = vmatpush.msra.mxu0 0.0
    %843 = vmatpush.msra.mxu0 0.0
    %844 = vmatpush.msra.mxu0 0.0
    %845 = vmatpush.msra.mxu0 0.0
    %846 = vmatpush.msra.mxu0 0.0
    %847 = vmatpush.msra.mxu0 0.0
    %848 = vmatpush.msra.mxu0 0.0
    %849 = vmatpush.msra.mxu0 0.0
    %850 = vmatpush.msra.mxu0 0.0
    %851 = vmatpush.msra.mxu0 0.0
    %852 = vmatpush.msra.mxu0 %v823
    %853 = vmatpush.msra.mxu0 %v822
    %854 = vmatpush.msra.mxu0 %v821
    %855 = vmatpush.msra.mxu0 %v820
    %856 = vmatmul.f32.gmra.mxu0 %v829
    %v857 = vpop.f32.mrf.mxu0
    %v858 = vadd.f32 %v826, %v857
    %859 = vmatmul.f32.gmra.mxu0 %v832
    %v860 = vpop.f32.mrf.mxu0
    %v861 = vadd.f32 %v826, %v860
    %862 = vmatmul.f32.gmra.mxu0 %v835
    %v863 = vpop.f32.mrf.mxu0
    %v864 = vadd.f32 %v826, %v863
    %865 = vmatmul.f32.gmra.mxu0 %v838
    %v866 = vpop.f32.mrf.mxu0
    %v867 = vadd.f32 %v826, %v866
    %868 = vdwg.mxu0
    %v869 = vadd.f32 %v858, %v229
    %v870 = vadd.f32 %v861, %v231
    %v871 = vadd.f32 %v864, %v230
    %v872 = vadd.f32 %v867, %v232
    %v873 = vld [vmem:[%s11] sm:$0x1]
    %v874 = vld [vmem:[%s12] sm:$0x1]
    %v875 = vsel %vm137, %v869, 0.0
    %876 = vadd.xlane.f32.xlu0 %v875
    %v877 = vpop.xlane.xlu0 %876
    %v878 = vsel %vm137, %v870, 0.0
    %879 = vadd.xlane.f32.xlu0 %v878
    %v880 = vpop.xlane.xlu0 %879
    %v881 = vsel %vm137, %v871, 0.0
    %882 = vadd.xlane.f32.xlu0 %v881
    %v883 = vpop.xlane.xlu0 %882
    %v884 = vsel %vm137, %v872, 0.0
    %885 = vadd.xlane.f32.xlu0 %v884
    %v886 = vpop.xlane.xlu0 %885
    %v887 = vmul.f32 %v877, %v150
    %v888 = vmul.f32 %v880, %v150
    %v889 = vmul.f32 %v883, %v150
    %v890 = vmul.f32 %v886, %v150
    %v891 = vsub.f32 %v869, %v887
    %v892 = vsub.f32 %v870, %v888
    %v893 = vsub.f32 %v871, %v889
    %v894 = vsub.f32 %v872, %v890
    %v895 = vmul.f32 %v891, %v891
    %v896 = vmul.f32 %v892, %v892
    %v897 = vmul.f32 %v893, %v893
    %v898 = vmul.f32 %v894, %v894
    %v899 = vsel %vm137, %v895, 0.0
    %900 = vadd.xlane.f32.xlu0 %v899
    %v901 = vpop.xlane.xlu0 %900
    %v902 = vsel %vm137, %v896, 0.0
    %903 = vadd.xlane.f32.xlu0 %v902
    %v904 = vpop.xlane.xlu0 %903
    %v905 = vsel %vm137, %v897, 0.0
    %906 = vadd.xlane.f32.xlu0 %v905
    %v907 = vpop.xlane.xlu0 %906
    %v908 = vsel %vm137, %v898, 0.0
    %909 = vadd.xlane.f32.xlu0 %v908
    %v910 = vpop.xlane.xlu0 %909
    %v911 = vmul.f32 %v901, %v150
    %v912 = vmul.f32 %v904, %v150
    %v913 = vmul.f32 %v907, %v150
    %v914 = vmul.f32 %v910, %v150
    %v915 = vadd.f32 %v911, 1e-12
    %v916 = vadd.f32 %v912, 1e-12
    %v917 = vadd.f32 %v913, 1e-12
    %v918 = vadd.f32 %v914, 1e-12
    %v919 = vrsqrt.pop %v915
    %v920 = vmul.f32 %v919, %v915
    %v921 = vmul.f32 %v920, %v919
    %v922 = vmul.f32 0.5, %v921
    %v923 = vsub.f32 1.5, %v922
    %v924 = vmul.f32 %v919, %v923
    %vm925 = vweird.f32 %v915
    %vm926 = vweird.f32 %v919
    %vm927 = vmor %vm925, %vm926
    %v928 = vsel %vm927, %v919, %v924
    %v929 = vrsqrt.pop %v916
    %v930 = vmul.f32 %v929, %v916
    %v931 = vmul.f32 %v930, %v929
    %v932 = vmul.f32 0.5, %v931
    %v933 = vsub.f32 1.5, %v932
    %v934 = vmul.f32 %v929, %v933
    %vm935 = vweird.f32 %v916
    %vm936 = vweird.f32 %v929
    %vm937 = vmor %vm935, %vm936
    %v938 = vsel %vm937, %v929, %v934
    %v939 = vrsqrt.pop %v917
    %v940 = vmul.f32 %v939, %v917
    %v941 = vmul.f32 %v940, %v939
    %v942 = vmul.f32 0.5, %v941
    %v943 = vsub.f32 1.5, %v942
    %v944 = vmul.f32 %v939, %v943
    %vm945 = vweird.f32 %v917
    %vm946 = vweird.f32 %v939
    %vm947 = vmor %vm945, %vm946
    %v948 = vsel %vm947, %v939, %v944
    %v949 = vrsqrt.pop %v918
    %v950 = vmul.f32 %v949, %v918
    %v951 = vmul.f32 %v950, %v949
    %v952 = vmul.f32 0.5, %v951
    %v953 = vsub.f32 1.5, %v952
    %v954 = vmul.f32 %v949, %v953
    %vm955 = vweird.f32 %v918
    %vm956 = vweird.f32 %v949
    %vm957 = vmor %vm955, %vm956
    %v958 = vsel %vm957, %v949, %v954
    %v959 = vmul.f32 %v891, %v928
    %v960 = vmul.f32 %v892, %v938
    %v961 = vmul.f32 %v893, %v948
    %v962 = vmul.f32 %v894, %v958
    %v964 = vperm.slane %v873, 0
    %v966 = vmul.f32 %v959, %v964
    %v967 = vmul.f32 %v960, %v964
    %v968 = vmul.f32 %v961, %v964
    %v969 = vmul.f32 %v962, %v964
    %v971 = vperm.slane %v874, 0
    %v973 = vadd.f32 %v966, %v971
    %v974 = vadd.f32 %v967, %v971
    %v975 = vadd.f32 %v968, %v971
    %v976 = vadd.f32 %v969, %v971
    %v977 = vld [vmem:[%s13] sm:$0xff]
    %v978 = vld [vmem:[%s13 + $0x8] sm:$0xff]
    %v979 = vld [vmem:[%s13 + $0x10] sm:$0xff]
    %v980 = vld [vmem:[%s13 + $0x18] sm:$0xff]
    %v981 = vld [vmem:[%s14] sm:$0x1]
    %v983 = vperm.slane %v981, 0
    %v986 = vsel %vm137, %v973, 0
    %v989 = vsel %vm137, %v974, 0
    %v992 = vsel %vm137, %v975, 0
    %v995 = vsel %vm137, %v976, 0
    %997 = vmatpush.msra.mxu0 0.0
    %998 = vmatpush.msra.mxu0 0.0
    %999 = vmatpush.msra.mxu0 0.0
    %1000 = vmatpush.msra.mxu0 0.0
    %1001 = vmatpush.msra.mxu0 0.0
    %1002 = vmatpush.msra.mxu0 0.0
    %1003 = vmatpush.msra.mxu0 0.0
    %1004 = vmatpush.msra.mxu0 0.0
    %1005 = vmatpush.msra.mxu0 0.0
    %1006 = vmatpush.msra.mxu0 0.0
    %1007 = vmatpush.msra.mxu0 0.0
    %1008 = vmatpush.msra.mxu0 0.0
    %1009 = vmatpush.msra.mxu0 %v980
    %1010 = vmatpush.msra.mxu0 %v979
    %1011 = vmatpush.msra.mxu0 %v978
    %1012 = vmatpush.msra.mxu0 %v977
    %1013 = vmatmul.f32.gmra.mxu0 %v986
    %v1014 = vpop.f32.mrf.mxu0
    %v1015 = vadd.f32 %v983, %v1014
    %1016 = vmatmul.f32.gmra.mxu0 %v989
    %v1017 = vpop.f32.mrf.mxu0
    %v1018 = vadd.f32 %v983, %v1017
    %1019 = vmatmul.f32.gmra.mxu0 %v992
    %v1020 = vpop.f32.mrf.mxu0
    %v1021 = vadd.f32 %v983, %v1020
    %1022 = vmatmul.f32.gmra.mxu0 %v995
    %v1023 = vpop.f32.mrf.mxu0
    %v1024 = vadd.f32 %v983, %v1023
    %1025 = vdwg.mxu0
    %v1026 = vmul.f32 %v1015, 0.5
    %v1027 = vmul.f32 %v1018, 0.5
    %v1028 = vmul.f32 %v1021, 0.5
    %v1029 = vmul.f32 %v1024, 0.5
    %v1030 = vmul.f32 %v1015, 0.044715
    %v1031 = vmul.f32 %v1018, 0.044715
    %v1032 = vmul.f32 %v1021, 0.044715
    %v1033 = vmul.f32 %v1024, 0.044715
    %v1034 = vmul.f32 %v1030, %v1015
    %v1035 = vmul.f32 %v1031, %v1018
    %v1036 = vmul.f32 %v1032, %v1021
    %v1037 = vmul.f32 %v1033, %v1024
    %v1038 = vmul.f32 %v1034, %v1015
    %v1039 = vmul.f32 %v1035, %v1018
    %v1040 = vmul.f32 %v1036, %v1021
    %v1041 = vmul.f32 %v1037, %v1024
    %v1042 = vadd.f32 %v1015, %v1038
    %v1043 = vadd.f32 %v1018, %v1039
    %v1044 = vadd.f32 %v1021, %v1040
    %v1045 = vadd.f32 %v1024, %v1041
    %v1046 = vmul.f32 %v1042, 0.7978846
    %v1047 = vmul.f32 %v1043, 0.7978846
    %v1048 = vmul.f32 %v1044, 0.7978846
    %v1049 = vmul.f32 %v1045, 0.7978846
    %v1050 = vtanh.pop %v1046
    %v1051 = vtanh.pop %v1047
    %v1052 = vtanh.pop %v1048
    %v1053 = vtanh.pop %v1049
    %v1054 = vadd.f32 %v1050, 1.0
    %v1055 = vadd.f32 %v1051, 1.0
    %v1056 = vadd.f32 %v1052, 1.0
    %v1057 = vadd.f32 %v1053, 1.0
    %v1058 = vmul.f32 %v1026, %v1054
    %v1059 = vmul.f32 %v1027, %v1055
    %v1060 = vmul.f32 %v1028, %v1056
    %v1061 = vmul.f32 %v1029, %v1057
    %v1062 = vld [vmem:[%s15] sm:$0xff]
    %v1063 = vld [vmem:[%s15 + $0x8] sm:$0xff]
    %v1064 = vld [vmem:[%s15 + $0x10] sm:$0xff]
    %v1065 = vld [vmem:[%s15 + $0x18] sm:$0xff]
    %v1066 = vld [vmem:[%s15 + $0x20] sm:$0xff]
    %v1067 = vld [vmem:[%s15 + $0x28] sm:$0xff]
    %v1068 = vld [vmem:[%s15 + $0x30] sm:$0xff]
    %v1069 = vld [vmem:[%s15 + $0x38] sm:$0xff]
    %v1070 = vld [vmem:[%s16] sm:$0x1]
    %v1072 = vperm.slane %v1070, 0
    %vm1074 = vcmask 523264
    %v1076 = vsel %vm1074, %v1058, 0
    %v1079 = vsel %vm1074, %v1059, 0
    %v1082 = vsel %vm1074, %v1060, 0
    %v1085 = vsel %vm1074, %v1061, 0
    %1087 = vmatpush.msra.mxu0 0.0
    %1088 = vmatpush.msra.mxu0 0.0
    %1089 = vmatpush.msra.mxu0 0.0
    %1090 = vmatpush.msra.mxu0 0.0
    %1091 = vmatpush.msra.mxu0 0.0
    %1092 = vmatpush.msra.mxu0 0.0
    %1093 = vmatpush.msra.mxu0 0.0
    %1094 = vmatpush.msra.mxu0 0.0
    %1095 = vmatpush.msra.mxu0 %v1069
    %1096 = vmatpush.msra.mxu0 %v1068
    %1097 = vmatpush.msra.mxu0 %v1067
    %1098 = vmatpush.msra.mxu0 %v1066
    %1099 = vmatpush.msra.mxu0 %v1065
    %1100 = vmatpush.msra.mxu0 %v1064
    %1101 = vmatpush.msra.mxu0 %v1063
    %1102 = vmatpush.msra.mxu0 %v1062
    %1103 = vmatmul.f32.gmra.mxu0 %v1076
    %v1104 = vpop.f32.mrf.mxu0
    %v1105 = vadd.f32 %v1072, %v1104
    %1106 = vmatmul.f32.gmra.mxu0 %v1079
    %v1107 = vpop.f32.mrf.mxu0
    %v1108 = vadd.f32 %v1072, %v1107
    %1109 = vmatmul.f32.gmra.mxu0 %v1082
    %v1110 = vpop.f32.mrf.mxu0
    %v1111 = vadd.f32 %v1072, %v1110
    %1112 = vmatmul.f32.gmra.mxu0 %v1085
    %v1113 = vpop.f32.mrf.mxu0
    %v1114 = vadd.f32 %v1072, %v1113
    %1115 = vdwg.mxu0
    %v1116 = vadd.f32 %v1105, %v973
    %v1117 = vadd.f32 %v1108, %v974
    %v1118 = vadd.f32 %v1111, %v975
    %v1119 = vadd.f32 %v1114, %v976
    %v1120 = vld [vmem:[%s17] sm:$0x1]
    %v1121 = vld [vmem:[%s18] sm:$0x1]
    %v1122 = vsel %vm137, %v1116, 0.0
    %1123 = vadd.xlane.f32.xlu0 %v1122
    %v1124 = vpop.xlane.xlu0 %1123
    %v1125 = vsel %vm137, %v1117, 0.0
    %1126 = vadd.xlane.f32.xlu0 %v1125
    %v1127 = vpop.xlane.xlu0 %1126
    %v1128 = vsel %vm137, %v1118, 0.0
    %1129 = vadd.xlane.f32.xlu0 %v1128
    %v1130 = vpop.xlane.xlu0 %1129
    %v1131 = vsel %vm137, %v1119, 0.0
    %1132 = vadd.xlane.f32.xlu0 %v1131
    %v1133 = vpop.xlane.xlu0 %1132
    %v1134 = vmul.f32 %v1124, %v150
    %v1135 = vmul.f32 %v1127, %v150
    %v1136 = vmul.f32 %v1130, %v150
    %v1137 = vmul.f32 %v1133, %v150
    %v1138 = vsub.f32 %v1116, %v1134
    %v1139 = vsub.f32 %v1117, %v1135
    %v1140 = vsub.f32 %v1118, %v1136
    %v1141 = vsub.f32 %v1119, %v1137
    %v1142 = vmul.f32 %v1138, %v1138
    %v1143 = vmul.f32 %v1139, %v1139
    %v1144 = vmul.f32 %v1140, %v1140
    %v1145 = vmul.f32 %v1141, %v1141
    %v1146 = vsel %vm137, %v1142, 0.0
    %1147 = vadd.xlane.f32.xlu0 %v1146
    %v1148 = vpop.xlane.xlu0 %1147
    %v1149 = vsel %vm137, %v1143, 0.0
    %1150 = vadd.xlane.f32.xlu0 %v1149
    %v1151 = vpop.xlane.xlu0 %1150
    %v1152 = vsel %vm137, %v1144, 0.0
    %1153 = vadd.xlane.f32.xlu0 %v1152
    %v1154 = vpop.xlane.xlu0 %1153
    %v1155 = vsel %vm137, %v1145, 0.0
    %1156 = vadd.xlane.f32.xlu0 %v1155
    %v1157 = vpop.xlane.xlu0 %1156
    %v1158 = vmul.f32 %v1148, %v150
    %v1159 = vmul.f32 %v1151, %v150
    %v1160 = vmul.f32 %v1154, %v150
    %v1161 = vmul.f32 %v1157, %v150
    %v1162 = vadd.f32 %v1158, 1e-12
    %v1163 = vadd.f32 %v1159, 1e-12
    %v1164 = vadd.f32 %v1160, 1e-12
    %v1165 = vadd.f32 %v1161, 1e-12
    %v1166 = vrsqrt.pop %v1162
    %v1167 = vmul.f32 %v1166, %v1162
    %v1168 = vmul.f32 %v1167, %v1166
    %v1169 = vmul.f32 0.5, %v1168
    %v1170 = vsub.f32 1.5, %v1169
    %v1171 = vmul.f32 %v1166, %v1170
    %vm1172 = vweird.f32 %v1162
    %vm1173 = vweird.f32 %v1166
    %vm1174 = vmor %vm1172, %vm1173
    %v1175 = vsel %vm1174, %v1166, %v1171
    %v1176 = vrsqrt.pop %v1163
    %v1177 = vmul.f32 %v1176, %v1163
    %v1178 = vmul.f32 %v1177, %v1176
    %v1179 = vmul.f32 0.5, %v1178
    %v1180 = vsub.f32 1.5, %v1179
    %v1181 = vmul.f32 %v1176, %v1180
    %vm1182 = vweird.f32 %v1163
    %vm1183 = vweird.f32 %v1176
    %vm1184 = vmor %vm1182, %vm1183
    %v1185 = vsel %vm1184, %v1176, %v1181
    %v1186 = vrsqrt.pop %v1164
    %v1187 = vmul.f32 %v1186, %v1164
    %v1188 = vmul.f32 %v1187, %v1186
    %v1189 = vmul.f32 0.5, %v1188
    %v1190 = vsub.f32 1.5, %v1189
    %v1191 = vmul.f32 %v1186, %v1190
    %vm1192 = vweird.f32 %v1164
    %vm1193 = vweird.f32 %v1186
    %vm1194 = vmor %vm1192, %vm1193
    %v1195 = vsel %vm1194, %v1186, %v1191
    %v1196 = vrsqrt.pop %v1165
    %v1197 = vmul.f32 %v1196, %v1165
    %v1198 = vmul.f32 %v1197, %v1196
    %v1199 = vmul.f32 0.5, %v1198
    %v1200 = vsub.f32 1.5, %v1199
    %v1201 = vmul.f32 %v1196, %v1200
    %vm1202 = vweird.f32 %v1165
    %vm1203 = vweird.f32 %v1196
    %vm1204 = vmor %vm1202, %vm1203
    %v1205 = vsel %vm1204, %v1196, %v1201
    %v1206 = vmul.f32 %v1138, %v1175
    %v1207 = vmul.f32 %v1139, %v1185
    %v1208 = vmul.f32 %v1140, %v1195
    %v1209 = vmul.f32 %v1141, %v1205
    %v1211 = vperm.slane %v1120, 0
    %v1213 = vmul.f32 %v1206, %v1211
    %v1214 = vmul.f32 %v1207, %v1211
    %v1215 = vmul.f32 %v1208, %v1211
    %v1216 = vmul.f32 %v1209, %v1211
    %v1218 = vperm.slane %v1121, 0
    %v1220 = vadd.f32 %v1213, %v1218
    %v1221 = vadd.f32 %v1214, %v1218
    %v1222 = vadd.f32 %v1215, %v1218
    %v1223 = vadd.f32 %v1216, %v1218
    %s1224 = scalar_lea.vmem %s7, 32
    %v1225 = vld [vmem:[%s1224] sm:$0xff]
    %v1226 = vld [vmem:[%s1224 + $0x8] sm:$0xff]
    %v1227 = vld [vmem:[%s1224 + $0x10] sm:$0xff]
    %v1228 = vld [vmem:[%s1224 + $0x18] sm:$0xff]
    %s1229 = scalar_lea.vmem %s8, 1
    %v1230 = vld [vmem:[%s1229] sm:$0x1]
    %v1232 = vperm.slane %v1230, 0
    %v1235 = vsel %vm137, %v1220, 0
    %v1238 = vsel %vm137, %v1221, 0
    %v1241 = vsel %vm137, %v1222, 0
    %v1244 = vsel %vm137, %v1223, 0
    %1246 = vmatpush.msra.mxu0 0.0
    %1247 = vmatpush.msra.mxu0 0.0
    %1248 = vmatpush.msra.mxu0 0.0
    %1249 = vmatpush.msra.mxu0 0.0
    %1250 = vmatpush.msra.mxu0 0.0
    %1251 = vmatpush.msra.mxu0 0.0
    %1252 = vmatpush.msra.mxu0 0.0
    %1253 = vmatpush.msra.mxu0 0.0
    %1254 = vmatpush.msra.mxu0 0.0
    %1255 = vmatpush.msra.mxu0 0.0
    %1256 = vmatpush.msra.mxu0 0.0
    %1257 = vmatpush.msra.mxu0 0.0
    %1258 = vmatpush.msra.mxu0 %v1228
    %1259 = vmatpush.msra.mxu0 %v1227
    %1260 = vmatpush.msra.mxu0 %v1226
    %1261 = vmatpush.msra.mxu0 %v1225
    %1262 = vmatmul.f32.gmra.mxu0 %v1235
    %v1263 = vpop.f32.mrf.mxu0
    %v1264 = vadd.f32 %v1232, %v1263
    %1265 = vmatmul.f32.gmra.mxu0 %v1238
    %v1266 = vpop.f32.mrf.mxu0
    %v1267 = vadd.f32 %v1232, %v1266
    %1268 = vmatmul.f32.gmra.mxu0 %v1241
    %v1269 = vpop.f32.mrf.mxu0
    %v1270 = vadd.f32 %v1232, %v1269
    %1271 = vmatmul.f32.gmra.mxu0 %v1244
    %v1272 = vpop.f32.mrf.mxu0
    %v1273 = vadd.f32 %v1232, %v1272
    %1274 = vdwg.mxu0
    %1279 = vrot.lane.b32.xlu0 %v1264, 112
    %v1280 = vpop.permute.xlu0 %1279
    %1281 = vrot.lane.b32.xlu0 %v1267, 112
    %v1282 = vpop.permute.xlu0 %1281
    %1283 = vrot.lane.b32.xlu0 %v1270, 112
    %v1284 = vpop.permute.xlu0 %1283
    %1285 = vrot.lane.b32.xlu0 %v1273, 112
    %v1286 = vpop.permute.xlu0 %1285
    %1287 = vrot.lane.b32.xlu0 %v1264, 96
    %v1288 = vpop.permute.xlu0 %1287
    %1289 = vrot.lane.b32.xlu0 %v1267, 96
    %v1290 = vpop.permute.xlu0 %1289
    %v1291 = vsel %vm311, %v1264, 0
    %v1293 = vsel %vm311, %v1267, 0
    %v1295 = vsel %vm311, %v1288, 0
    %v1297 = vsel %vm311, %v1290, 0
    %1299 = vmatpush.xpose.msra.mxu0 0.0
    %1300 = vmatpush.xpose.msra.mxu0 0.0
    %1301 = vmatpush.xpose.msra.mxu0 0.0
    %1302 = vmatpush.xpose.msra.mxu0 0.0
    %1303 = vmatpush.xpose.msra.mxu0 0.0
    %1304 = vmatpush.xpose.msra.mxu0 0.0
    %1305 = vmatpush.xpose.msra.mxu0 0.0
    %1306 = vmatpush.xpose.msra.mxu0 0.0
    %1307 = vmatpush.xpose.msra.mxu0 0.0
    %1308 = vmatpush.xpose.msra.mxu0 0.0
    %1309 = vmatpush.xpose.msra.mxu0 0.0
    %1310 = vmatpush.xpose.msra.mxu0 0.0
    %1311 = vmatpush.xpose.msra.mxu0 0.0
    %1312 = vmatpush.xpose.msra.mxu0 0.0
    %1313 = vmatpush.xpose.msra.mxu0 %v1297
    %1314 = vmatpush.xpose.msra.mxu0 %v1295
    %1315 = vmatmul.f32.gmra.mxu0 %v1291
    %v1316 = vpop.f32.mrf.mxu0
    %v1317 = vadd.f32 0.0, %v1316
    %1318 = vmatmul.f32.gmra.mxu0 %v1293
    %v1319 = vpop.f32.mrf.mxu0
    %v1320 = vadd.f32 0.0, %v1319
    %1321 = vdwg.mxu0
    %1322 = vrot.lane.b32.xlu0 %v1270, 96
    %v1323 = vpop.permute.xlu0 %1322
    %1324 = vrot.lane.b32.xlu0 %v1273, 96
    %v1325 = vpop.permute.xlu0 %1324
    %v1326 = vsel %vm311, %v1270, 0
    %v1328 = vsel %vm311, %v1273, 0
    %v1330 = vsel %vm311, %v1323, 0
    %v1332 = vsel %vm311, %v1325, 0
    %1334 = vmatpush.xpose.msra.mxu0 0.0
    %1335 = vmatpush.xpose.msra.mxu0 0.0
    %1336 = vmatpush.xpose.msra.mxu0 0.0
    %1337 = vmatpush.xpose.msra.mxu0 0.0
    %1338 = vmatpush.xpose.msra.mxu0 0.0
    %1339 = vmatpush.xpose.msra.mxu0 0.0
    %1340 = vmatpush.xpose.msra.mxu0 0.0
    %1341 = vmatpush.xpose.msra.mxu0 0.0
    %1342 = vmatpush.xpose.msra.mxu0 0.0
    %1343 = vmatpush.xpose.msra.mxu0 0.0
    %1344 = vmatpush.xpose.msra.mxu0 0.0
    %1345 = vmatpush.xpose.msra.mxu0 0.0
    %1346 = vmatpush.xpose.msra.mxu0 0.0
    %1347 = vmatpush.xpose.msra.mxu0 0.0
    %1348 = vmatpush.xpose.msra.mxu0 %v1332
    %1349 = vmatpush.xpose.msra.mxu0 %v1330
    %1350 = vmatmul.f32.gmra.mxu0 %v1326
    %v1351 = vpop.f32.mrf.mxu0
    %v1352 = vadd.f32 0.0, %v1351
    %1353 = vmatmul.f32.gmra.mxu0 %v1328
    %v1354 = vpop.f32.mrf.mxu0
    %v1355 = vadd.f32 0.0, %v1354
    %1356 = vdwg.mxu0
    %1357 = vrot.lane.b32.xlu0 %v1280, 96
    %v1358 = vpop.permute.xlu0 %1357
    %1359 = vrot.lane.b32.xlu0 %v1282, 96
    %v1360 = vpop.permute.xlu0 %1359
    %v1361 = vsel %vm311, %v1280, 0
    %v1363 = vsel %vm311, %v1282, 0
    %v1365 = vsel %vm311, %v1358, 0
    %v1367 = vsel %vm311, %v1360, 0
    %1369 = vmatpush.xpose.msra.mxu0 0.0
    %1370 = vmatpush.xpose.msra.mxu0 0.0
    %1371 = vmatpush.xpose.msra.mxu0 0.0
    %1372 = vmatpush.xpose.msra.mxu0 0.0
    %1373 = vmatpush.xpose.msra.mxu0 0.0
    %1374 = vmatpush.xpose.msra.mxu0 0.0
    %1375 = vmatpush.xpose.msra.mxu0 0.0
    %1376 = vmatpush.xpose.msra.mxu0 0.0
    %1377 = vmatpush.xpose.msra.mxu0 0.0
    %1378 = vmatpush.xpose.msra.mxu0 0.0
    %1379 = vmatpush.xpose.msra.mxu0 0.0
    %1380 = vmatpush.xpose.msra.mxu0 0.0
    %1381 = vmatpush.xpose.msra.mxu0 0.0
    %1382 = vmatpush.xpose.msra.mxu0 0.0
    %1383 = vmatpush.xpose.msra.mxu0 %v1367
    %1384 = vmatpush.xpose.msra.mxu0 %v1365
    %1385 = vmatmul.f32.gmra.mxu0 %v1361
    %v1386 = vpop.f32.mrf.mxu0
    %v1387 = vadd.f32 0.0, %v1386
    %1388 = vmatmul.f32.gmra.mxu0 %v1363
    %v1389 = vpop.f32.mrf.mxu0
    %v1390 = vadd.f32 0.0, %v1389
    %1391 = vdwg.mxu0
    %1392 = vrot.lane.b32.xlu0 %v1284, 96
    %v1393 = vpop.permute.xlu0 %1392
    %1394 = vrot.lane.b32.xlu0 %v1286, 96
    %v1395 = vpop.permute.xlu0 %1394
    %v1396 = vsel %vm311, %v1284, 0
    %v1398 = vsel %vm311, %v1286, 0
    %v1400 = vsel %vm311, %v1393, 0
    %v1402 = vsel %vm311, %v1395, 0
    %1404 = vmatpush.xpose.msra.mxu0 0.0
    %1405 = vmatpush.xpose.msra.mxu0 0.0
    %1406 = vmatpush.xpose.msra.mxu0 0.0
    %1407 = vmatpush.xpose.msra.mxu0 0.0
    %1408 = vmatpush.xpose.msra.mxu0 0.0
    %1409 = vmatpush.xpose.msra.mxu0 0.0
    %1410 = vmatpush.xpose.msra.mxu0 0.0
    %1411 = vmatpush.xpose.msra.mxu0 0.0
    %1412 = vmatpush.xpose.msra.mxu0 0.0
    %1413 = vmatpush.xpose.msra.mxu0 0.0
    %1414 = vmatpush.xpose.msra.mxu0 0.0
    %1415 = vmatpush.xpose.msra.mxu0 0.0
    %1416 = vmatpush.xpose.msra.mxu0 0.0
    %1417 = vmatpush.xpose.msra.mxu0 0.0
    %1418 = vmatpush.xpose.msra.mxu0 %v1402
    %1419 = vmatpush.xpose.msra.mxu0 %v1400
    %1420 = vmatmul.f32.gmra.mxu0 %v1396
    %v1421 = vpop.f32.mrf.mxu0
    %v1422 = vadd.f32 0.0, %v1421
    %1423 = vmatmul.f32.gmra.mxu0 %v1398
    %v1424 = vpop.f32.mrf.mxu0
    %v1425 = vadd.f32 0.0, %v1424
    %1426 = vdwg.mxu0
    %v1427 = vmul.f32 %v1317, 0.25
    %v1428 = vmul.f32 %v1320, 0.25
    %v1429 = vmul.f32 %v1352, 0.25
    %v1430 = vmul.f32 %v1355, 0.25
    %v1431 = vmul.f32 %v1387, 0.25
    %v1432 = vmul.f32 %v1390, 0.25
    %v1433 = vmul.f32 %v1422, 0.25
    %v1434 = vmul.f32 %v1425, 0.25
    %v1435 = vadd.f32 %v1427, %v456
    %v1436 = vadd.f32 %v1428, %v456
    %v1437 = vadd.f32 %v1429, %v457
    %v1438 = vadd.f32 %v1430, %v457
    %v1439 = vadd.f32 %v1431, %v456
    %v1440 = vadd.f32 %v1432, %v456
    %v1441 = vadd.f32 %v1433, %v457
    %v1442 = vadd.f32 %v1434, %v457
    %v1443 = vsel %vm311, %v1435, -inf
    %1444 = vmax.xlane.f32.xlu0 %v1443
    %v1445 = vpop.xlane.xlu0 %1444
    %v1446 = vsel %vm311, %v1436, -inf
    %1447 = vmax.xlane.f32.xlu0 %v1446
    %v1448 = vpop.xlane.xlu0 %1447
    %v1449 = vsel %vm311, %v1437, -inf
    %1450 = vmax.xlane.f32.xlu0 %v1449
    %v1451 = vpop.xlane.xlu0 %1450
    %v1452 = vsel %vm311, %v1438, -inf
    %1453 = vmax.xlane.f32.xlu0 %v1452
    %v1454 = vpop.xlane.xlu0 %1453
    %v1455 = vsel %vm311, %v1439, -inf
    %1456 = vmax.xlane.f32.xlu0 %v1455
    %v1457 = vpop.xlane.xlu0 %1456
    %v1458 = vsel %vm311, %v1440, -inf
    %1459 = vmax.xlane.f32.xlu0 %v1458
    %v1460 = vpop.xlane.xlu0 %1459
    %v1461 = vsel %vm311, %v1441, -inf
    %1462 = vmax.xlane.f32.xlu0 %v1461
    %v1463 = vpop.xlane.xlu0 %1462
    %v1464 = vsel %vm311, %v1442, -inf
    %1465 = vmax.xlane.f32.xlu0 %v1464
    %v1466 = vpop.xlane.xlu0 %1465
    %v1467 = vsub.f32 %v1435, %v1445
    %v1468 = vsub.f32 %v1436, %v1448
    %v1469 = vsub.f32 %v1437, %v1451
    %v1470 = vsub.f32 %v1438, %v1454
    %v1471 = vsub.f32 %v1439, %v1457
    %v1472 = vsub.f32 %v1440, %v1460
    %v1473 = vsub.f32 %v1441, %v1463
    %v1474 = vsub.f32 %v1442, %v1466
    %v1475 = vmul.f32 %v1467, 1.442695
    %v1476 = vpow.pop %v1475
    %v1477 = vmul.f32 %v1468, 1.442695
    %v1478 = vpow.pop %v1477
    %v1479 = vmul.f32 %v1469, 1.442695
    %v1480 = vpow.pop %v1479
    %v1481 = vmul.f32 %v1470, 1.442695
    %v1482 = vpow.pop %v1481
    %v1483 = vmul.f32 %v1471, 1.442695
    %v1484 = vpow.pop %v1483
    %v1485 = vmul.f32 %v1472, 1.442695
    %v1486 = vpow.pop %v1485
    %v1487 = vmul.f32 %v1473, 1.442695
    %v1488 = vpow.pop %v1487
    %v1489 = vmul.f32 %v1474, 1.442695
    %v1490 = vpow.pop %v1489
    %v1491 = vsel %vm311, %v1476, 0.0
    %1492 = vadd.xlane.f32.xlu0 %v1491
    %v1493 = vpop.xlane.xlu0 %1492
    %v1494 = vsel %vm311, %v1478, 0.0
    %1495 = vadd.xlane.f32.xlu0 %v1494
    %v1496 = vpop.xlane.xlu0 %1495
    %v1497 = vsel %vm311, %v1480, 0.0
    %1498 = vadd.xlane.f32.xlu0 %v1497
    %v1499 = vpop.xlane.xlu0 %1498
    %v1500 = vsel %vm311, %v1482, 0.0
    %1501 = vadd.xlane.f32.xlu0 %v1500
    %v1502 = vpop.xlane.xlu0 %1501
    %v1503 = vsel %vm311, %v1484, 0.0
    %1504 = vadd.xlane.f32.xlu0 %v1503
    %v1505 = vpop.xlane.xlu0 %1504
    %v1506 = vsel %vm311, %v1486, 0.0
    %1507 = vadd.xlane.f32.xlu0 %v1506
    %v1508 = vpop.xlane.xlu0 %1507
    %v1509 = vsel %vm311, %v1488, 0.0
    %1510 = vadd.xlane.f32.xlu0 %v1509
    %v1511 = vpop.xlane.xlu0 %1510
    %v1512 = vsel %vm311, %v1490, 0.0
    %1513 = vadd.xlane.f32.xlu0 %v1512
    %v1514 = vpop.xlane.xlu0 %1513
    %v1515 = vrcp.pop %v1493
    %v1516 = vmul.f32 %v1493, %v1515
    %v1517 = vsub.f32 1.0, %v1516
    %v1518 = vmul.f32 %v1515, %v1517
    %v1519 = vadd.f32 %v1515, %v1518
    %vm1520 = vweird.f32 %v1493
    %vm1521 = vweird.f32 %v1515
    %vm1522 = vmor %vm1520, %vm1521
    %v1523 = vsel %vm1522, %v1515, %v1519
    %v1524 = vand.u32 2147483647, %v1493
    %vm1525 = vcmp.eq.f32.partialorder %v1524, 8.507059e+37
    %v1526 = vand.u32 %v1493, 2147483648
    %v1527 = vor.u32 1.1754944e-38, %v1526
    %v1528 = vsel %vm1525, %v1527, %v1523
    %v1529 = vmul.f32 %v1476, %v1528
    %v1530 = vrcp.pop %v1496
    %v1531 = vmul.f32 %v1496, %v1530
    %v1532 = vsub.f32 1.0, %v1531
    %v1533 = vmul.f32 %v1530, %v1532
    %v1534 = vadd.f32 %v1530, %v1533
    %vm1535 = vweird.f32 %v1496
    %vm1536 = vweird.f32 %v1530
    %vm1537 = vmor %vm1535, %vm1536
    %v1538 = vsel %vm1537, %v1530, %v1534
    %v1539 = vand.u32 2147483647, %v1496
    %vm1540 = vcmp.eq.f32.partialorder %v1539, 8.507059e+37
    %v1541 = vand.u32 %v1496, 2147483648
    %v1542 = vor.u32 1.1754944e-38, %v1541
    %v1543 = vsel %vm1540, %v1542, %v1538
    %v1544 = vmul.f32 %v1478, %v1543
    %v1545 = vrcp.pop %v1499
    %v1546 = vmul.f32 %v1499, %v1545
    %v1547 = vsub.f32 1.0, %v1546
    %v1548 = vmul.f32 %v1545, %v1547
    %v1549 = vadd.f32 %v1545, %v1548
    %vm1550 = vweird.f32 %v1499
    %vm1551 = vweird.f32 %v1545
    %vm1552 = vmor %vm1550, %vm1551
    %v1553 = vsel %vm1552, %v1545, %v1549
    %v1554 = vand.u32 2147483647, %v1499
    %vm1555 = vcmp.eq.f32.partialorder %v1554, 8.507059e+37
    %v1556 = vand.u32 %v1499, 2147483648
    %v1557 = vor.u32 1.1754944e-38, %v1556
    %v1558 = vsel %vm1555, %v1557, %v1553
    %v1559 = vmul.f32 %v1480, %v1558
    %v1560 = vrcp.pop %v1502
    %v1561 = vmul.f32 %v1502, %v1560
    %v1562 = vsub.f32 1.0, %v1561
    %v1563 = vmul.f32 %v1560, %v1562
    %v1564 = vadd.f32 %v1560, %v1563
    %vm1565 = vweird.f32 %v1502
    %vm1566 = vweird.f32 %v1560
    %vm1567 = vmor %vm1565, %vm1566
    %v1568 = vsel %vm1567, %v1560, %v1564
    %v1569 = vand.u32 2147483647, %v1502
    %vm1570 = vcmp.eq.f32.partialorder %v1569, 8.507059e+37
    %v1571 = vand.u32 %v1502, 2147483648
    %v1572 = vor.u32 1.1754944e-38, %v1571
    %v1573 = vsel %vm1570, %v1572, %v1568
    %v1574 = vmul.f32 %v1482, %v1573
    %v1575 = vrcp.pop %v1505
    %v1576 = vmul.f32 %v1505, %v1575
    %v1577 = vsub.f32 1.0, %v1576
    %v1578 = vmul.f32 %v1575, %v1577
    %v1579 = vadd.f32 %v1575, %v1578
    %vm1580 = vweird.f32 %v1505
    %vm1581 = vweird.f32 %v1575
    %vm1582 = vmor %vm1580, %vm1581
    %v1583 = vsel %vm1582, %v1575, %v1579
    %v1584 = vand.u32 2147483647, %v1505
    %vm1585 = vcmp.eq.f32.partialorder %v1584, 8.507059e+37
    %v1586 = vand.u32 %v1505, 2147483648
    %v1587 = vor.u32 1.1754944e-38, %v1586
    %v1588 = vsel %vm1585, %v1587, %v1583
    %v1589 = vmul.f32 %v1484, %v1588
    %v1590 = vrcp.pop %v1508
    %v1591 = vmul.f32 %v1508, %v1590
    %v1592 = vsub.f32 1.0, %v1591
    %v1593 = vmul.f32 %v1590, %v1592
    %v1594 = vadd.f32 %v1590, %v1593
    %vm1595 = vweird.f32 %v1508
    %vm1596 = vweird.f32 %v1590
    %vm1597 = vmor %vm1595, %vm1596
    %v1598 = vsel %vm1597, %v1590, %v1594
    %v1599 = vand.u32 2147483647, %v1508
    %vm1600 = vcmp.eq.f32.partialorder %v1599, 8.507059e+37
    %v1601 = vand.u32 %v1508, 2147483648
    %v1602 = vor.u32 1.1754944e-38, %v1601
    %v1603 = vsel %vm1600, %v1602, %v1598
    %v1604 = vmul.f32 %v1486, %v1603
    %v1605 = vrcp.pop %v1511
    %v1606 = vmul.f32 %v1511, %v1605
    %v1607 = vsub.f32 1.0, %v1606
    %v1608 = vmul.f32 %v1605, %v1607
    %v1609 = vadd.f32 %v1605, %v1608
    %vm1610 = vweird.f32 %v1511
    %vm1611 = vweird.f32 %v1605
    %vm1612 = vmor %vm1610, %vm1611
    %v1613 = vsel %vm1612, %v1605, %v1609
    %v1614 = vand.u32 2147483647, %v1511
    %vm1615 = vcmp.eq.f32.partialorder %v1614, 8.507059e+37
    %v1616 = vand.u32 %v1511, 2147483648
    %v1617 = vor.u32 1.1754944e-38, %v1616
    %v1618 = vsel %vm1615, %v1617, %v1613
    %v1619 = vmul.f32 %v1488, %v1618
    %v1620 = vrcp.pop %v1514
    %v1621 = vmul.f32 %v1514, %v1620
    %v1622 = vsub.f32 1.0, %v1621
    %v1623 = vmul.f32 %v1620, %v1622
    %v1624 = vadd.f32 %v1620, %v1623
    %vm1625 = vweird.f32 %v1514
    %vm1626 = vweird.f32 %v1620
    %vm1627 = vmor %vm1625, %vm1626
    %v1628 = vsel %vm1627, %v1620, %v1624
    %v1629 = vand.u32 2147483647, %v1514
    %vm1630 = vcmp.eq.f32.partialorder %v1629, 8.507059e+37
    %v1631 = vand.u32 %v1514, 2147483648
    %v1632 = vor.u32 1.1754944e-38, %v1631
    %v1633 = vsel %vm1630, %v1632, %v1628
    %v1634 = vmul.f32 %v1490, %v1633
    %1635 = vrot.lane.b32.xlu0 %v1264, 64
    %v1636 = vpop.permute.xlu0 %1635
    %1637 = vrot.lane.b32.xlu0 %v1267, 64
    %v1638 = vpop.permute.xlu0 %1637
    %v1642 = vsel %vm311, %v1529, 0
    %v1645 = vsel %vm311, %v1544, 0
    %1647 = vmatpush.msra.mxu0 0.0
    %1648 = vmatpush.msra.mxu0 0.0
    %1649 = vmatpush.msra.mxu0 0.0
    %1650 = vmatpush.msra.mxu0 0.0
    %1651 = vmatpush.msra.mxu0 0.0
    %1652 = vmatpush.msra.mxu0 0.0
    %1653 = vmatpush.msra.mxu0 0.0
    %1654 = vmatpush.msra.mxu0 0.0
    %1655 = vmatpush.msra.mxu0 0.0
    %1656 = vmatpush.msra.mxu0 0.0
    %1657 = vmatpush.msra.mxu0 0.0
    %1658 = vmatpush.msra.mxu0 0.0
    %1659 = vmatpush.msra.mxu0 0.0
    %1660 = vmatpush.msra.mxu0 0.0
    %1661 = vmatpush.msra.mxu0 %v1638
    %1662 = vmatpush.msra.mxu0 %v1636
    %1663 = vmatmul.f32.gmra.mxu0 %v1642
    %v1664 = vpop.f32.mrf.mxu0
    %v1665 = vadd.f32 0.0, %v1664
    %1666 = vmatmul.f32.gmra.mxu0 %v1645
    %v1667 = vpop.f32.mrf.mxu0
    %v1668 = vadd.f32 0.0, %v1667
    %1669 = vdwg.mxu0
    %1670 = vrot.lane.b32.xlu0 %v1270, 64
    %v1671 = vpop.permute.xlu0 %1670
    %1672 = vrot.lane.b32.xlu0 %v1273, 64
    %v1673 = vpop.permute.xlu0 %1672
    %v1677 = vsel %vm311, %v1559, 0
    %v1680 = vsel %vm311, %v1574, 0
    %1682 = vmatpush.msra.mxu0 0.0
    %1683 = vmatpush.msra.mxu0 0.0
    %1684 = vmatpush.msra.mxu0 0.0
    %1685 = vmatpush.msra.mxu0 0.0
    %1686 = vmatpush.msra.mxu0 0.0
    %1687 = vmatpush.msra.mxu0 0.0
    %1688 = vmatpush.msra.mxu0 0.0
    %1689 = vmatpush.msra.mxu0 0.0
    %1690 = vmatpush.msra.mxu0 0.0
    %1691 = vmatpush.msra.mxu0 0.0
    %1692 = vmatpush.msra.mxu0 0.0
    %1693 = vmatpush.msra.mxu0 0.0
    %1694 = vmatpush.msra.mxu0 0.0
    %1695 = vmatpush.msra.mxu0 0.0
    %1696 = vmatpush.msra.mxu0 %v1673
    %1697 = vmatpush.msra.mxu0 %v1671
    %1698 = vmatmul.f32.gmra.mxu0 %v1677
    %v1699 = vpop.f32.mrf.mxu0
    %v1700 = vadd.f32 0.0, %v1699
    %1701 = vmatmul.f32.gmra.mxu0 %v1680
    %v1702 = vpop.f32.mrf.mxu0
    %v1703 = vadd.f32 0.0, %v1702
    %1704 = vdwg.mxu0
    %1705 = vrot.lane.b32.xlu0 %v1280, 64
    %v1706 = vpop.permute.xlu0 %1705
    %1707 = vrot.lane.b32.xlu0 %v1282, 64
    %v1708 = vpop.permute.xlu0 %1707
    %v1712 = vsel %vm311, %v1589, 0
    %v1715 = vsel %vm311, %v1604, 0
    %1717 = vmatpush.msra.mxu0 0.0
    %1718 = vmatpush.msra.mxu0 0.0
    %1719 = vmatpush.msra.mxu0 0.0
    %1720 = vmatpush.msra.mxu0 0.0
    %1721 = vmatpush.msra.mxu0 0.0
    %1722 = vmatpush.msra.mxu0 0.0
    %1723 = vmatpush.msra.mxu0 0.0
    %1724 = vmatpush.msra.mxu0 0.0
    %1725 = vmatpush.msra.mxu0 0.0
    %1726 = vmatpush.msra.mxu0 0.0
    %1727 = vmatpush.msra.mxu0 0.0
    %1728 = vmatpush.msra.mxu0 0.0
    %1729 = vmatpush.msra.mxu0 0.0
    %1730 = vmatpush.msra.mxu0 0.0
    %1731 = vmatpush.msra.mxu0 %v1708
    %1732 = vmatpush.msra.mxu0 %v1706
    %1733 = vmatmul.f32.gmra.mxu0 %v1712
    %v1734 = vpop.f32.mrf.mxu0
    %v1735 = vadd.f32 0.0, %v1734
    %1736 = vmatmul.f32.gmra.mxu0 %v1715
    %v1737 = vpop.f32.mrf.mxu0
    %v1738 = vadd.f32 0.0, %v1737
    %1739 = vdwg.mxu0
    %1740 = vrot.lane.b32.xlu0 %v1284, 64
    %v1741 = vpop.permute.xlu0 %1740
    %1742 = vrot.lane.b32.xlu0 %v1286, 64
    %v1743 = vpop.permute.xlu0 %1742
    %v1747 = vsel %vm311, %v1619, 0
    %v1750 = vsel %vm311, %v1634, 0
    %1752 = vmatpush.msra.mxu0 0.0
    %1753 = vmatpush.msra.mxu0 0.0
    %1754 = vmatpush.msra.mxu0 0.0
    %1755 = vmatpush.msra.mxu0 0.0
    %1756 = vmatpush.msra.mxu0 0.0
    %1757 = vmatpush.msra.mxu0 0.0
    %1758 = vmatpush.msra.mxu0 0.0
    %1759 = vmatpush.msra.mxu0 0.0
    %1760 = vmatpush.msra.mxu0 0.0
    %1761 = vmatpush.msra.mxu0 0.0
    %1762 = vmatpush.msra.mxu0 0.0
    %1763 = vmatpush.msra.mxu0 0.0
    %1764 = vmatpush.msra.mxu0 0.0
    %1765 = vmatpush.msra.mxu0 0.0
    %1766 = vmatpush.msra.mxu0 %v1743
    %1767 = vmatpush.msra.mxu0 %v1741
    %1768 = vmatmul.f32.gmra.mxu0 %v1747
    %v1769 = vpop.f32.mrf.mxu0
    %v1770 = vadd.f32 0.0, %v1769
    %1771 = vmatmul.f32.gmra.mxu0 %v1750
    %v1772 = vpop.f32.mrf.mxu0
    %v1773 = vadd.f32 0.0, %v1772
    %1774 = vdwg.mxu0
    %1779 = vrot.lane.b32.xlu0 %v1735, 16
    %v1780 = vpop.permute.xlu0 %1779
    %1781 = vrot.lane.b32.xlu0 %v1738, 16
    %v1782 = vpop.permute.xlu0 %1781
    %1783 = vrot.lane.b32.xlu0 %v1770, 16
    %v1784 = vpop.permute.xlu0 %1783
    %1785 = vrot.lane.b32.xlu0 %v1773, 16
    %v1786 = vpop.permute.xlu0 %1785
    %v1791 = vsel %vm311, %v1665, %v1780
    %v1792 = vsel %vm311, %v1668, %v1782
    %v1793 = vsel %vm311, %v1700, %v1784
    %v1794 = vsel %vm311, %v1703, %v1786
    %s1795 = scalar_lea.vmem %s9, 32
    %v1796 = vld [vmem:[%s1795] sm:$0xff]
    %v1797 = vld [vmem:[%s1795 + $0x8] sm:$0xff]
    %v1798 = vld [vmem:[%s1795 + $0x10] sm:$0xff]
    %v1799 = vld [vmem:[%s1795 + $0x18] sm:$0xff]
    %s1800 = scalar_lea.vmem %s10, 1
    %v1801 = vld [vmem:[%s1800] sm:$0x1]
    %v1803 = vperm.slane %v1801, 0
    %v1806 = vsel %vm137, %v1791, 0
    %v1809 = vsel %vm137, %v1792, 0
    %v1812 = vsel %vm137, %v1793, 0
    %v1815 = vsel %vm137, %v1794, 0
    %1817 = vmatpush.msra.mxu0 0.0
    %1818 = vmatpush.msra.mxu0 0.0
    %1819 = vmatpush.msra.mxu0 0.0
    %1820 = vmatpush.msra.mxu0 0.0
    %1821 = vmatpush.msra.mxu0 0.0
    %1822 = vmatpush.msra.mxu0 0.0
    %1823 = vmatpush.msra.mxu0 0.0
    %1824 = vmatpush.msra.mxu0 0.0
    %1825 = vmatpush.msra.mxu0 0.0
    %1826 = vmatpush.msra.mxu0 0.0
    %1827 = vmatpush.msra.mxu0 0.0
    %1828 = vmatpush.msra.mxu0 0.0
    %1829 = vmatpush.msra.mxu0 %v1799
    %1830 = vmatpush.msra.mxu0 %v1798
    %1831 = vmatpush.msra.mxu0 %v1797
    %1832 = vmatpush.msra.mxu0 %v1796
    %1833 = vmatmul.f32.gmra.mxu0 %v1806
    %v1834 = vpop.f32.mrf.mxu0
    %v1835 = vadd.f32 %v1803, %v1834
    %1836 = vmatmul.f32.gmra.mxu0 %v1809
    %v1837 = vpop.f32.mrf.mxu0
    %v1838 = vadd.f32 %v1803, %v1837
    %1839 = vmatmul.f32.gmra.mxu0 %v1812
    %v1840 = vpop.f32.mrf.mxu0
    %v1841 = vadd.f32 %v1803, %v1840
    %1842 = vmatmul.f32.gmra.mxu0 %v1815
    %v1843 = vpop.f32.mrf.mxu0
    %v1844 = vadd.f32 %v1803, %v1843
    %1845 = vdwg.mxu0
    %v1846 = vadd.f32 %v1835, %v1220
    %v1847 = vadd.f32 %v1838, %v1221
    %v1848 = vadd.f32 %v1841, %v1222
    %v1849 = vadd.f32 %v1844, %v1223
    %s1850 = scalar_lea.vmem %s11, 1
    %v1851 = vld [vmem:[%s1850] sm:$0x1]
    %s1852 = scalar_lea.vmem %s12, 1
    %v1853 = vld [vmem:[%s1852] sm:$0x1]
    %v1854 = vsel %vm137, %v1846, 0.0
    %1855 = vadd.xlane.f32.xlu0 %v1854
    %v1856 = vpop.xlane.xlu0 %1855
    %v1857 = vsel %vm137, %v1847, 0.0
    %1858 = vadd.xlane.f32.xlu0 %v1857
    %v1859 = vpop.xlane.xlu0 %1858
    %v1860 = vsel %vm137, %v1848, 0.0
    %1861 = vadd.xlane.f32.xlu0 %v1860
    %v1862 = vpop.xlane.xlu0 %1861
    %v1863 = vsel %vm137, %v1849, 0.0
    %1864 = vadd.xlane.f32.xlu0 %v1863
    %v1865 = vpop.xlane.xlu0 %1864
    %v1866 = vmul.f32 %v1856, %v150
    %v1867 = vmul.f32 %v1859, %v150
    %v1868 = vmul.f32 %v1862, %v150
    %v1869 = vmul.f32 %v1865, %v150
    %v1870 = vsub.f32 %v1846, %v1866
    %v1871 = vsub.f32 %v1847, %v1867
    %v1872 = vsub.f32 %v1848, %v1868
    %v1873 = vsub.f32 %v1849, %v1869
    %v1874 = vmul.f32 %v1870, %v1870
    %v1875 = vmul.f32 %v1871, %v1871
    %v1876 = vmul.f32 %v1872, %v1872
    %v1877 = vmul.f32 %v1873, %v1873
    %v1878 = vsel %vm137, %v1874, 0.0
    %1879 = vadd.xlane.f32.xlu0 %v1878
    %v1880 = vpop.xlane.xlu0 %1879
    %v1881 = vsel %vm137, %v1875, 0.0
    %1882 = vadd.xlane.f32.xlu0 %v1881
    %v1883 = vpop.xlane.xlu0 %1882
    %v1884 = vsel %vm137, %v1876, 0.0
    %1885 = vadd.xlane.f32.xlu0 %v1884
    %v1886 = vpop.xlane.xlu0 %1885
    %v1887 = vsel %vm137, %v1877, 0.0
    %1888 = vadd.xlane.f32.xlu0 %v1887
    %v1889 = vpop.xlane.xlu0 %1888
    %v1890 = vmul.f32 %v1880, %v150
    %v1891 = vmul.f32 %v1883, %v150
    %v1892 = vmul.f32 %v1886, %v150
    %v1893 = vmul.f32 %v1889, %v150
    %v1894 = vadd.f32 %v1890, 1e-12
    %v1895 = vadd.f32 %v1891, 1e-12
    %v1896 = vadd.f32 %v1892, 1e-12
    %v1897 = vadd.f32 %v1893, 1e-12
    %v1898 = vrsqrt.pop %v1894
    %v1899 = vmul.f32 %v1898, %v1894
    %v1900 = vmul.f32 %v1899, %v1898
    %v1901 = vmul.f32 0.5, %v1900
    %v1902 = vsub.f32 1.5, %v1901
    %v1903 = vmul.f32 %v1898, %v1902
    %vm1904 = vweird.f32 %v1894
    %vm1905 = vweird.f32 %v1898
    %vm1906 = vmor %vm1904, %vm1905
    %v1907 = vsel %vm1906, %v1898, %v1903
    %v1908 = vrsqrt.pop %v1895
    %v1909 = vmul.f32 %v1908, %v1895
    %v1910 = vmul.f32 %v1909, %v1908
    %v1911 = vmul.f32 0.5, %v1910
    %v1912 = vsub.f32 1.5, %v1911
    %v1913 = vmul.f32 %v1908, %v1912
    %vm1914 = vweird.f32 %v1895
    %vm1915 = vweird.f32 %v1908
    %vm1916 = vmor %vm1914, %vm1915
    %v1917 = vsel %vm1916, %v1908, %v1913
    %v1918 = vrsqrt.pop %v1896
    %v1919 = vmul.f32 %v1918, %v1896
    %v1920 = vmul.f32 %v1919, %v1918
    %v1921 = vmul.f32 0.5, %v1920
    %v1922 = vsub.f32 1.5, %v1921
    %v1923 = vmul.f32 %v1918, %v1922
    %vm1924 = vweird.f32 %v1896
    %vm1925 = vweird.f32 %v1918
    %vm1926 = vmor %vm1924, %vm1925
    %v1927 = vsel %vm1926, %v1918, %v1923
    %v1928 = vrsqrt.pop %v1897
    %v1929 = vmul.f32 %v1928, %v1897
    %v1930 = vmul.f32 %v1929, %v1928
    %v1931 = vmul.f32 0.5, %v1930
    %v1932 = vsub.f32 1.5, %v1931
    %v1933 = vmul.f32 %v1928, %v1932
    %vm1934 = vweird.f32 %v1897
    %vm1935 = vweird.f32 %v1928
    %vm1936 = vmor %vm1934, %vm1935
    %v1937 = vsel %vm1936, %v1928, %v1933
    %v1938 = vmul.f32 %v1870, %v1907
    %v1939 = vmul.f32 %v1871, %v1917
    %v1940 = vmul.f32 %v1872, %v1927
    %v1941 = vmul.f32 %v1873, %v1937
    %v1943 = vperm.slane %v1851, 0
    %v1945 = vmul.f32 %v1938, %v1943
    %v1946 = vmul.f32 %v1939, %v1943
    %v1947 = vmul.f32 %v1940, %v1943
    %v1948 = vmul.f32 %v1941, %v1943
    %v1950 = vperm.slane %v1853, 0
    %v1952 = vadd.f32 %v1945, %v1950
    %v1953 = vadd.f32 %v1946, %v1950
    %v1954 = vadd.f32 %v1947, %v1950
    %v1955 = vadd.f32 %v1948, %v1950
    %s1956 = scalar_lea.vmem %s13, 32
    %v1957 = vld [vmem:[%s1956] sm:$0xff]
    %v1958 = vld [vmem:[%s1956 + $0x8] sm:$0xff]
    %v1959 = vld [vmem:[%s1956 + $0x10] sm:$0xff]
    %v1960 = vld [vmem:[%s1956 + $0x18] sm:$0xff]
    %s1961 = scalar_lea.vmem %s14, 1
    %v1962 = vld [vmem:[%s1961] sm:$0x1]
    %v1964 = vperm.slane %v1962, 0
    %v1967 = vsel %vm137, %v1952, 0
    %v1970 = vsel %vm137, %v1953, 0
    %v1973 = vsel %vm137, %v1954, 0
    %v1976 = vsel %vm137, %v1955, 0
    %1978 = vmatpush.msra.mxu0 0.0
    %1979 = vmatpush.msra.mxu0 0.0
    %1980 = vmatpush.msra.mxu0 0.0
    %1981 = vmatpush.msra.mxu0 0.0
    %1982 = vmatpush.msra.mxu0 0.0
    %1983 = vmatpush.msra.mxu0 0.0
    %1984 = vmatpush.msra.mxu0 0.0
    %1985 = vmatpush.msra.mxu0 0.0
    %1986 = vmatpush.msra.mxu0 0.0
    %1987 = vmatpush.msra.mxu0 0.0
    %1988 = vmatpush.msra.mxu0 0.0
    %1989 = vmatpush.msra.mxu0 0.0
    %1990 = vmatpush.msra.mxu0 %v1960
    %1991 = vmatpush.msra.mxu0 %v1959
    %1992 = vmatpush.msra.mxu0 %v1958
    %1993 = vmatpush.msra.mxu0 %v1957
    %1994 = vmatmul.f32.gmra.mxu0 %v1967
    %v1995 = vpop.f32.mrf.mxu0
    %v1996 = vadd.f32 %v1964, %v1995
    %1997 = vmatmul.f32.gmra.mxu0 %v1970
    %v1998 = vpop.f32.mrf.mxu0
    %v1999 = vadd.f32 %v1964, %v1998
    %2000 = vmatmul.f32.gmra.mxu0 %v1973
    %v2001 = vpop.f32.mrf.mxu0
    %v2002 = vadd.f32 %v1964, %v2001
    %2003 = vmatmul.f32.gmra.mxu0 %v1976
    %v2004 = vpop.f32.mrf.mxu0
    %v2005 = vadd.f32 %v1964, %v2004
    %2006 = vdwg.mxu0
    %v2007 = vmul.f32 %v1996, 0.5
    %v2008 = vmul.f32 %v1999, 0.5
    %v2009 = vmul.f32 %v2002, 0.5
    %v2010 = vmul.f32 %v2005, 0.5
    %v2011 = vmul.f32 %v1996, 0.044715
    %v2012 = vmul.f32 %v1999, 0.044715
    %v2013 = vmul.f32 %v2002, 0.044715
    %v2014 = vmul.f32 %v2005, 0.044715
    %v2015 = vmul.f32 %v2011, %v1996
    %v2016 = vmul.f32 %v2012, %v1999
    %v2017 = vmul.f32 %v2013, %v2002
    %v2018 = vmul.f32 %v2014, %v2005
    %v2019 = vmul.f32 %v2015, %v1996
    %v2020 = vmul.f32 %v2016, %v1999
    %v2021 = vmul.f32 %v2017, %v2002
    %v2022 = vmul.f32 %v2018, %v2005
    %v2023 = vadd.f32 %v1996, %v2019
    %v2024 = vadd.f32 %v1999, %v2020
    %v2025 = vadd.f32 %v2002, %v2021
    %v2026 = vadd.f32 %v2005, %v2022
    %v2027 = vmul.f32 %v2023, 0.7978846
    %v2028 = vmul.f32 %v2024, 0.7978846
    %v2029 = vmul.f32 %v2025, 0.7978846
    %v2030 = vmul.f32 %v2026, 0.7978846
    %v2031 = vtanh.pop %v2027
    %v2032 = vtanh.pop %v2028
    %v2033 = vtanh.pop %v2029
    %v2034 = vtanh.pop %v2030
    %v2035 = vadd.f32 %v2031, 1.0
    %v2036 = vadd.f32 %v2032, 1.0
    %v2037 = vadd.f32 %v2033, 1.0
    %v2038 = vadd.f32 %v2034, 1.0
    %v2039 = vmul.f32 %v2007, %v2035
    %v2040 = vmul.f32 %v2008, %v2036
    %v2041 = vmul.f32 %v2009, %v2037
    %v2042 = vmul.f32 %v2010, %v2038
    %s2043 = scalar_lea.vmem %s15, 64
    %v2044 = vld [vmem:[%s2043] sm:$0xff]
    %v2045 = vld [vmem:[%s2043 + $0x8] sm:$0xff]
    %v2046 = vld [vmem:[%s2043 + $0x10] sm:$0xff]
    %v2047 = vld [vmem:[%s2043 + $0x18] sm:$0xff]
    %v2048 = vld [vmem:[%s2043 + $0x20] sm:$0xff]
    %v2049 = vld [vmem:[%s2043 + $0x28] sm:$0xff]
    %v2050 = vld [vmem:[%s2043 + $0x30] sm:$0xff]
    %v2051 = vld [vmem:[%s2043 + $0x38] sm:$0xff]
    %s2052 = scalar_lea.vmem %s16, 1
    %v2053 = vld [vmem:[%s2052] sm:$0x1]
    %v2055 = vperm.slane %v2053, 0
    %v2058 = vsel %vm1074, %v2039, 0
    %v2061 = vsel %vm1074, %v2040, 0
    %v2064 = vsel %vm1074, %v2041, 0
    %v2067 = vsel %vm1074, %v2042, 0
    %2069 = vmatpush.msra.mxu0 0.0
    %2070 = vmatpush.msra.mxu0 0.0
    %2071 = vmatpush.msra.mxu0 0.0
    %2072 = vmatpush.msra.mxu0 0.0
    %2073 = vmatpush.msra.mxu0 0.0
    %2074 = vmatpush.msra.mxu0 0.0
    %2075 = vmatpush.msra.mxu0 0.0
    %2076 = vmatpush.msra.mxu0 0.0
    %2077 = vmatpush.msra.mxu0 %v2051
    %2078 = vmatpush.msra.mxu0 %v2050
    %2079 = vmatpush.msra.mxu0 %v2049
    %2080 = vmatpush.msra.mxu0 %v2048
    %2081 = vmatpush.msra.mxu0 %v2047
    %2082 = vmatpush.msra.mxu0 %v2046
    %2083 = vmatpush.msra.mxu0 %v2045
    %2084 = vmatpush.msra.mxu0 %v2044
    %2085 = vmatmul.f32.gmra.mxu0 %v2058
    %v2086 = vpop.f32.mrf.mxu0
    %v2087 = vadd.f32 %v2055, %v2086
    %2088 = vmatmul.f32.gmra.mxu0 %v2061
    %v2089 = vpop.f32.mrf.mxu0
    %2090 = vmatmul.f32.gmra.mxu0 %v2064
    %v2091 = vpop.f32.mrf.mxu0
    %v2092 = vadd.f32 %v2055, %v2091
    %2093 = vmatmul.f32.gmra.mxu0 %v2067
    %v2094 = vpop.f32.mrf.mxu0
    %2095 = vdwg.mxu0
    %v2096 = vadd.f32 %v2087, %v1952
    %v2097 = vadd.f32 %v2092, %v1954
    %s2098 = scalar_lea.vmem %s17, 1
    %v2099 = vld [vmem:[%s2098] sm:$0x1]
    %s2100 = scalar_lea.vmem %s18, 1
    %v2101 = vld [vmem:[%s2100] sm:$0x1]
    %v2102 = vsel %vm137, %v2096, 0.0
    %2103 = vadd.xlane.f32.xlu0 %v2102
    %v2104 = vpop.xlane.xlu0 %2103
    %v2105 = vsel %vm137, %v2097, 0.0
    %2106 = vadd.xlane.f32.xlu0 %v2105
    %v2107 = vpop.xlane.xlu0 %2106
    %v2108 = vmul.f32 %v2104, %v150
    %v2109 = vmul.f32 %v2107, %v150
    %v2110 = vsub.f32 %v2096, %v2108
    %v2111 = vsub.f32 %v2097, %v2109
    %v2112 = vmul.f32 %v2110, %v2110
    %v2113 = vmul.f32 %v2111, %v2111
    %v2114 = vsel %vm137, %v2112, 0.0
    %2115 = vadd.xlane.f32.xlu0 %v2114
    %v2116 = vpop.xlane.xlu0 %2115
    %v2117 = vsel %vm137, %v2113, 0.0
    %2118 = vadd.xlane.f32.xlu0 %v2117
    %v2119 = vpop.xlane.xlu0 %2118
    %v2120 = vmul.f32 %v2116, %v150
    %v2121 = vmul.f32 %v2119, %v150
    %v2122 = vadd.f32 %v2120, 1e-12
    %v2123 = vadd.f32 %v2121, 1e-12
    %v2124 = vrsqrt.pop %v2122
    %v2125 = vmul.f32 %v2124, %v2122
    %v2126 = vmul.f32 %v2125, %v2124
    %v2127 = vmul.f32 0.5, %v2126
    %v2128 = vsub.f32 1.5, %v2127
    %v2129 = vmul.f32 %v2124, %v2128
    %vm2130 = vweird.f32 %v2122
    %vm2131 = vweird.f32 %v2124
    %vm2132 = vmor %vm2130, %vm2131
    %v2133 = vsel %vm2132, %v2124, %v2129
    %v2134 = vrsqrt.pop %v2123
    %v2135 = vmul.f32 %v2134, %v2123
    %v2136 = vmul.f32 %v2135, %v2134
    %v2137 = vmul.f32 0.5, %v2136
    %v2138 = vsub.f32 1.5, %v2137
    %v2139 = vmul.f32 %v2134, %v2138
    %vm2140 = vweird.f32 %v2123
    %vm2141 = vweird.f32 %v2134
    %vm2142 = vmor %vm2140, %vm2141
    %v2143 = vsel %vm2142, %v2134, %v2139
    %v2144 = vmul.f32 %v2110, %v2133
    %v2145 = vmul.f32 %v2111, %v2143
    %v2147 = vperm.slane %v2099, 0
    %v2149 = vmul.f32 %v2144, %v2147
    %v2150 = vmul.f32 %v2145, %v2147
    %v2152 = vperm.slane %v2101, 0
    %v2154 = vadd.f32 %v2149, %v2152
    %v2155 = vadd.f32 %v2150, %v2152
    %v2156 = vld [vmem:[%s19] sm:$0xff]
    %v2157 = vld [vmem:[%s19 + $0x8] sm:$0xff]
    %v2158 = vld [vmem:[%s19 + $0x10] sm:$0xff]
    %v2159 = vld [vmem:[%s19 + $0x18] sm:$0xff]
    %v2160 = vld [vmem:[%s20] sm:$0x1]
    %v2162 = vperm.slane %v2160, 0
    %v2166 = vrot.slane %v2155, 7
    %vm2167 = vcmask 1041409
    %v2168 = vsel %vm2167, %v2166, %v2154
    %v2169 = vsel %vm137, %v2168, 0
    %2171 = vmatpush.msra.mxu0 0.0
    %2172 = vmatpush.msra.mxu0 0.0
    %2173 = vmatpush.msra.mxu0 0.0
    %2174 = vmatpush.msra.mxu0 0.0
    %2175 = vmatpush.msra.mxu0 0.0
    %2176 = vmatpush.msra.mxu0 0.0
    %2177 = vmatpush.msra.mxu0 0.0
    %2178 = vmatpush.msra.mxu0 0.0
    %2179 = vmatpush.msra.mxu0 0.0
    %2180 = vmatpush.msra.mxu0 0.0
    %2181 = vmatpush.msra.mxu0 0.0
    %2182 = vmatpush.msra.mxu0 0.0
    %2183 = vmatpush.msra.mxu0 %v2159
    %2184 = vmatpush.msra.mxu0 %v2158
    %2185 = vmatpush.msra.mxu0 %v2157
    %2186 = vmatpush.msra.mxu0 %v2156
    %2187 = vmatmul.f32.gmra.mxu0 %v2169
    %v2188 = vpop.f32.mrf.mxu0
    %v2189 = vadd.f32 %v2162, %v2188
    %2190 = vdwg.mxu0
    %v2191 = vtanh.pop %v2189
    %v2192 = vld [vmem:[%s21] sm:$0xff]
    %v2193 = vld [vmem:[%s21 + $0x8] sm:$0xff]
    %v2194 = vld [vmem:[%s21 + $0x10] sm:$0xff]
    %v2195 = vld [vmem:[%s21 + $0x18] sm:$0xff]
    %v2196 = vld [vmem:[%s22] sm:$0x1]
    %v2198 = vperm.slane %v2196, 0
    %v2201 = vsel %vm137, %v2191, 0
    %2203 = vmatpush.msra.mxu0 0.0
    %2204 = vmatpush.msra.mxu0 0.0
    %2205 = vmatpush.msra.mxu0 0.0
    %2206 = vmatpush.msra.mxu0 0.0
    %2207 = vmatpush.msra.mxu0 0.0
    %2208 = vmatpush.msra.mxu0 0.0
    %2209 = vmatpush.msra.mxu0 0.0
    %2210 = vmatpush.msra.mxu0 0.0
    %2211 = vmatpush.msra.mxu0 0.0
    %2212 = vmatpush.msra.mxu0 0.0
    %2213 = vmatpush.msra.mxu0 0.0
    %2214 = vmatpush.msra.mxu0 0.0
    %2215 = vmatpush.msra.mxu0 %v2195
    %2216 = vmatpush.msra.mxu0 %v2194
    %2217 = vmatpush.msra.mxu0 %v2193
    %2218 = vmatpush.msra.mxu0 %v2192
    %2219 = vmatmul.f32.gmra.mxu0 %v2201
    %v2220 = vpop.f32.mrf.mxu0
    %v2221 = vadd.f32 %v2198, %v2220
    %2222 = vdwg.mxu0
    %vm2223 = vcmask 17408
    %2224 = vst.msk [vmem:[#allocation2] sm:$0x3] %vm2223, %v2221
    // Predicated region
    $region94: #{tpu_custom_call.1} parent=1 // pred_check
      _
    $region95: #{tpu_custom_call.1} parent=1 // pred_check_branch
      %2226 = sbr.rel (0) target = $region97
    $region96: #{tpu_custom_call.1} parent=1 // pred_region
      %2228 = vsyncadd [#allocation3], 0
      %s2230 = sshll.u32 [#allocation2], 4
      %s2231 = int_to_ptr.vmem [resolvable:$true] %s2230
      %s2232 = sshll.u32 %s23, 4
      %s2233 = int_to_ptr.hbm [resolvable:$true] %s2232
      %2235 = dma.vmem_to_hbm [thread:$0]  %s2231, 32, %s2233, [#allocation3]
    $region97: #{tpu_custom_call.1} parent=1 // pred_fallthru
      _
    // Predicated region
    $region98: #{tpu_custom_call.1} parent=1 // pred_check
      _
    $region99: #{tpu_custom_call.1} parent=1 // pred_check_branch
      %2237 = sbr.rel (0) target = $region101
    $region100: #{tpu_custom_call.1} parent=1 // pred_region
      %2239 = dma.done [#allocation3], 32
    $region101: #{tpu_custom_call.1} parent=1 // pred_fallthru
      _
    %2240 = vsyncpa [#allocation3], 1

</llo_original>
